<compile_context>
chip_gen: v7x
topology: tpu7x:2x2x1
jax: 0.10.0
libtpu: 0.0.40
codegen_flags: <defaults>
</compile_context>

<pallas_src>
import functools

import jax
import jax.numpy as jnp
from jax import lax
from jax.experimental import pallas as pl
from jax.experimental.pallas import tpu as pltpu


def decoder_attention_kernel(
    x_ref,                      # (block_b*N, C)   mm_dtype
    wqkv_ref, bqkv_ref,         # (C, 3C) mm_dtype, (1, 3C) f32
    wproj_ref, bproj_ref,       # (C, C)  mm_dtype, (1, C)  f32
    o_ref,                      # (block_b*N, C)   x.dtype
    attn_ref,                   # (block_b, heads, N, n_pad) f32
    ctx_ref,                    # (N, C) mm_dtype VMEM scratch (per-batch context)
    *, heads: int, block_b: int, seq: int, scale: float, bf16: bool,
):
    _, C = x_ref.shape
    n = seq
    hd = C // heads
    n_pad = attn_ref.shape[-1]
    mm_dtype = jnp.bfloat16 if bf16 else jnp.float32

    # (1) qkv projection over the whole (block_b*N, C) slab: one big-M MXU matmul.
    #     Weights arrive already in mm_dtype (no in-kernel weight cast); bias in f32.
    qkv = jnp.dot(x_ref[...], wqkv_ref[...],
                  preferred_element_type=jnp.float32) + bqkv_ref[0]      # f32

    # Lane-expander for the attn output when N < 128: constant [I_N | 0] matrix.
    # Padding via a tiny MXU dot is guaranteed to lower (avoids relying on
    # unaligned minor-dim concatenation) and keeps the attn store fully lane-dense.
    if n_pad > n:
        expand = (lax.broadcasted_iota(jnp.int32, (n, n_pad), 0) ==
                  lax.broadcasted_iota(jnp.int32, (n, n_pad), 1)).astype(jnp.float32)

    wproj = wproj_ref[...]        # mm_dtype, used directly by the MXU
    bproj = bproj_ref[0]          # f32

    # TODO(synk): convert this outer loop to lax.fori_loop with pl.ds row slices
    # if block_b is ever allowed to grow past ~4 (here it is capped at 8).
    for b in range(block_b):
        qkv_b = qkv[b * n:(b + 1) * n]                     # (n, 3C) static row slice
        qkv_mm = qkv_b.astype(mm_dtype) if bf16 else qkv_b # small activation cast only

        for h in range(heads):
            q = qkv_mm[:, h * hd:(h + 1) * hd]
            k = qkv_mm[:, C + h * hd:C + (h + 1) * hd]
            v = qkv_mm[:, 2 * C + h * hd:2 * C + (h + 1) * hd]

            # q @ k^T without materializing k.T: contract dim 1 of both operands.
            logits = lax.dot_general(
                q, k, (((1,), (1,)), ((), ())),
                preferred_element_type=jnp.float32) * scale             # (n, n) f32
            logits = logits - jnp.max(logits, axis=-1, keepdims=True)
            p = jnp.exp(logits)
            # exact reciprocal: returned attn rows sum to 1 (see review note)
            p = p * pl.reciprocal(jnp.sum(p, axis=-1, keepdims=True), approx=False)

            # lane-dense attn store (padded to n_pad lanes when n < 128)
            p_store = jnp.dot(p, expand, preferred_element_type=jnp.float32) \
                if n_pad > n else p
            attn_ref[b, h] = p_store.astype(attn_ref.dtype)

            # per-head context -> lane-contiguous columns of the (N, C) scratch
            hv = jnp.dot(p.astype(mm_dtype), v,
                         preferred_element_type=jnp.float32)            # (n, hd) f32
            ctx_ref[:, h * hd:(h + 1) * hd] = hv.astype(ctx_ref.dtype)

        # (3) fused output projection at full K = C (single MXU pass per row-block)
        out_b = jnp.dot(ctx_ref[...], wproj,
                        preferred_element_type=jnp.float32) + bproj     # (n, C) f32
        o_ref[b * n:(b + 1) * n, :] = out_b.astype(o_ref.dtype)


def _pick_block_b(B, N, target_rows=256, max_rows=1024, min_grid_steps=2, max_unroll=8):
    """Largest divisor of B whose slab fits the row cap, preferring >= min_grid_steps
    grid steps (so the 'parallel' batch axis can shard across v7x's 2 TensorCores)."""
    divisors = [d for d in range(1, B + 1) if B % d == 0]
    ok = [d for d in divisors if d * N <= max_rows and d <= max_unroll] or [1]
    cands = [d for d in ok if (B // d) >= min_grid_steps] or ok
    for d in cands:
        if d * N >= target_rows:
            return d
    return cands[-1]


def decoder_attention(x, params, *, heads: int, bf16_matmul: bool = False):
    B, N, C = x.shape
    assert C % heads == 0
    hd = C // heads
    scale = float(hd) ** (-0.5)                 # applied in-kernel (one VPU mul)

    mm_dtype = jnp.bfloat16 if bf16_matmul else x.dtype
    # Pre-cast MXU operands once here (ideally the caller would keep params in
    # bf16 persistently): halves weight DMA bytes and removes in-kernel casts.
    x_mm = x.astype(mm_dtype)
    wqkv = params["wqkv"].astype(mm_dtype)
    wproj = params["wproj"].astype(mm_dtype)
    bqkv = params["bqkv"].astype(jnp.float32)
    bproj = params["bproj"].astype(jnp.float32)

    block_b = _pick_block_b(B, N)               # B=2 -> block_b=1 -> grid=(2,)
    grid = (B // block_b,)
    rows = block_b * N
    n_pad = N if N >= 128 else 128              # lane-dense attn minor dim

    # Flatten batch into rows in the wrapper (free: merging leading dims of a
    # row-major array is layout-preserving) so the kernel never reshapes.
    x2d = x_mm.reshape(B * N, C)

    itemsize = jnp.dtype(mm_dtype).itemsize
    weight_bytes = (C * 3 * C + C * C) * itemsize
    # Only worth single-buffering grid-invariant weights at realistic C (v7x 64 MiB VMEM);
    # at toy sizes keep the default (path not exercised in the test below).
    single_buffer_weights = weight_bytes > (8 << 20)

    def const_spec(shape):
        idx = lambda b: (0,) * len(shape)
        if single_buffer_weights:
            return pl.BlockSpec(shape, idx, pipeline_mode=pl.Buffered(1))
        return pl.BlockSpec(shape, idx)

    in_specs = [
        pl.BlockSpec((rows, C), lambda b: (b, 0)),          # x slab
        const_spec((C, 3 * C)), const_spec((1, 3 * C)),     # qkv weights (grid-invariant)
        const_spec((C, C)), const_spec((1, C)),             # proj weights
    ]
    out_specs = (
        pl.BlockSpec((rows, C), lambda b: (b, 0)),
        pl.BlockSpec((block_b, heads, N, n_pad), lambda b: (b, 0, 0, 0)),
    )
    out_shape = (
        jax.ShapeDtypeStruct((B * N, C), x.dtype),
        jax.ShapeDtypeStruct((B, heads, N, n_pad), jnp.float32),
    )

    # Rough per-step VMEM need; only raise the scoped limit when it matters.
    vmem_need = (2 * rows * C * (itemsize + jnp.dtype(x.dtype).itemsize)
                 + 2 * block_b * heads * N * n_pad * 4
                 + (1 if single_buffer_weights else 2) * weight_bytes
                 + rows * 3 * C * 4 + N * C * itemsize)
    vmem_limit = int(vmem_need * 3 // 2) if vmem_need > (24 << 20) else None

    kernel = functools.partial(decoder_attention_kernel, heads=heads,
                               block_b=block_b, seq=N, scale=scale, bf16=bf16_matmul)
    o2d, attn_pad = pl.pallas_call(
        kernel,
        out_shape=out_shape,
        grid_spec=pltpu.PrefetchScalarGridSpec(
            num_scalar_prefetch=0,
            grid=grid,
            in_specs=in_specs,
            out_specs=out_specs,
            scratch_shapes=[pltpu.VMEM((N, C), mm_dtype)],
        ),
        compiler_params=pltpu.CompilerParams(
            dimension_semantics=("parallel",),   # batch slabs are independent
            vmem_limit_bytes=vmem_limit,
        ),
    )(x2d, wqkv, bqkv, wproj, bproj)

    out = o2d.reshape(B, N, C)
    attn = attn_pad[..., :N] if n_pad != N else attn_pad
    return out, attn


# ----- plain-JAX reference (mirrors the PyTorch forward, default branch) -----
def decoder_attention_ref(x, p, *, heads: int):
    B, N, C = x.shape
    hd = C // heads
    scale = hd ** (-0.5)
    qkv = x @ p["wqkv"] + p["bqkv"][0]
    qkv = qkv.reshape(B, N, 3, heads, hd).transpose(2, 0, 3, 1, 4)
    q, k, v = qkv[0], qkv[1], qkv[2]
    attn = jnp.einsum("bhnd,bhmd->bhnm", q, k) * scale
    attn = jax.nn.softmax(attn, axis=-1)
    out = jnp.einsum("bhnm,bhmd->bhnd", attn, v).transpose(0, 2, 1, 3).reshape(B, N, C)
    out = out @ p["wproj"] + p["bproj"][0]
    return out, attn


def make_params(key, dim):
    ks = jax.random.split(key, 4)
    s = 0.02
    return {
        "wqkv": s * jax.random.normal(ks[0], (dim, 3 * dim), jnp.float32),
        "bqkv": s * jax.random.normal(ks[1], (1, 3 * dim), jnp.float32),
        "wproj": s * jax.random.normal(ks[2], (dim, dim), jnp.float32),
        "bproj": s * jax.random.normal(ks[3], (1, dim), jnp.float32),
    }


if __name__ == "__main__":
    # Small config: dim=128, heads=4 (head_dim=32), dropout=0.0 (identity / eval).
    B, N, C, HEADS = 2, 16, 128, 4
    key = jax.random.PRNGKey(0)
    kx, kp = jax.random.split(key)
    x = jax.random.normal(kx, (B, N, C), jnp.float32)
    params = make_params(kp, C)

    # TODO(synk): mask branch and without_colorattn branch of the PyTorch forward
    # are not implemented (default forward path only); dropouts are identity (eval).

    ref_out, ref_attn = decoder_attention_ref(x, params, heads=HEADS)

    # f32 path (matches PyTorch numerics; exact softmax reciprocal).
    out, attn = decoder_attention(x, params, heads=HEADS, bf16_matmul=False)
    out, attn = jax.block_until_ready((out, attn))
    assert out.shape == (B, N, C) and attn.shape == (B, HEADS, N, N)
    assert jnp.allclose(out, ref_out, atol=2e-3, rtol=2e-3), \
        float(jnp.abs(out - ref_out).max())
    assert jnp.allclose(attn, ref_attn, atol=2e-3, rtol=2e-3), \
        float(jnp.abs(attn - ref_attn).max())

    # bf16 MXU-operand path (f32 accumulation / f32 softmax) — looser tolerance:
    # the dominant error is p and the qkv activations rounded to bf16 at the MXU.
    out_bf, attn_bf = decoder_attention(x, params, heads=HEADS, bf16_matmul=True)
    out_bf, attn_bf = jax.block_until_ready((out_bf, attn_bf))
    assert jnp.allclose(out_bf, ref_out, atol=3e-2, rtol=3e-2), \
        float(jnp.abs(out_bf - ref_out).max())
    assert jnp.allclose(attn_bf, ref_attn, atol=3e-2, rtol=3e-2), \
        float(jnp.abs(attn_bf - ref_attn).max())

    print("KERNEL_OK")
</pallas_src>

<mosaic_0001>
module attributes {stable_mosaic.version = 11 : i64} {
  func.func @decoder_attention_kernel(%arg0: i32, %arg1: memref<16x128xf32, #tpu.memory_space<vmem>>, %arg2: memref<128x384xf32, #tpu.memory_space<vmem>>, %arg3: memref<1x384xf32, #tpu.memory_space<vmem>>, %arg4: memref<128x128xf32, #tpu.memory_space<vmem>>, %arg5: memref<1x128xf32, #tpu.memory_space<vmem>>, %arg6: memref<16x128xf32, #tpu.memory_space<vmem>>, %arg7: memref<1x4x16x128xf32, #tpu.memory_space<vmem>>, %arg8: memref<16x128xf32, #tpu.memory_space<vmem>>) attributes {dimension_semantics = [#tpu.dimension_semantics<parallel>], iteration_bounds = array<i64: 2>, scalar_prefetch = 0 : i64, scratch_operands = 1 : i64, tpu.core_type = #tpu.core_type<tc>, window_params = [{transform_indices = @transform_0, window_bounds = array<i64: 16, 128>}, {pipeline_mode = #tpu.pipeline_mode<synchronous>, transform_indices = @transform_1, window_bounds = array<i64: 128, 384>}, {pipeline_mode = #tpu.pipeline_mode<synchronous>, transform_indices = @transform_2, window_bounds = array<i64: 1, 384>}, {pipeline_mode = #tpu.pipeline_mode<synchronous>, transform_indices = @transform_3, window_bounds = array<i64: 128, 128>}, {pipeline_mode = #tpu.pipeline_mode<synchronous>, transform_indices = @transform_4, window_bounds = array<i64: 1, 128>}, {transform_indices = @transform_5, window_bounds = array<i64: 16, 128>}, {transform_indices = @transform_6, window_bounds = array<i64: 1, 4, 16, 128>}]} {
    %c0 = arith.constant 0 : index
    %c0_0 = arith.constant 0 : index
    %0 = vector.load %arg1[%c0, %c0_0] : memref<16x128xf32, #tpu.memory_space<vmem>>, vector<16x128xf32>
    %c0_1 = arith.constant 0 : index
    %c0_2 = arith.constant 0 : index
    %1 = vector.load %arg2[%c0_1, %c0_2] : memref<128x384xf32, #tpu.memory_space<vmem>>, vector<128x384xf32>
    %cst = arith.constant dense<0.000000e+00> : vector<16x384xf32>
    %2 = tpu.matmul %0, %1, %cst {dimension_numbers = #tpu.dot_dimension_numbers<[1], [0], [0], [1], [0, 0, 1, 1], [], []>} : vector<16x128xf32>, vector<128x384xf32>, vector<16x384xf32> -> vector<16x384xf32>
    %c0_3 = arith.constant 0 : index
    %c0_4 = arith.constant 0 : index
    %3 = vector.load %arg3[%c0_3, %c0_4] : memref<1x384xf32, #tpu.memory_space<vmem>>, vector<1x384xf32>
    %4 = vector.shape_cast %3 : vector<1x384xf32> to vector<384xf32>
    %5 = vector.shape_cast %4 : vector<384xf32> to vector<1x384xf32>
    %6 = vector.broadcast %5 : vector<1x384xf32> to vector<16x384xf32>
    %7 = arith.addf %2, %6 : vector<16x384xf32>
    %8 = tpu.iota {dimensions = array<i32: 0>} : vector<16x128xi32>
    %9 = tpu.iota {dimensions = array<i32: 1>} : vector<16x128xi32>
    %10 = arith.cmpi eq, %8, %9 : vector<16x128xi32>
    %11 = arith.extui %10 : vector<16x128xi1> to vector<16x128xi32>
    %12 = arith.sitofp %11 : vector<16x128xi32> to vector<16x128xf32>
    %c0_5 = arith.constant 0 : index
    %c0_6 = arith.constant 0 : index
    %13 = vector.load %arg4[%c0_5, %c0_6] : memref<128x128xf32, #tpu.memory_space<vmem>>, vector<128x128xf32>
    %c0_7 = arith.constant 0 : index
    %c0_8 = arith.constant 0 : index
    %14 = vector.load %arg5[%c0_7, %c0_8] : memref<1x128xf32, #tpu.memory_space<vmem>>, vector<1x128xf32>
    %15 = vector.shape_cast %14 : vector<1x128xf32> to vector<128xf32>
    %16 = vector.extract_strided_slice %7 {offsets = [0, 0], sizes = [16, 32], strides = [1, 1]} : vector<16x384xf32> to vector<16x32xf32>
    %17 = vector.extract_strided_slice %7 {offsets = [0, 128], sizes = [16, 32], strides = [1, 1]} : vector<16x384xf32> to vector<16x32xf32>
    %18 = vector.extract_strided_slice %7 {offsets = [0, 256], sizes = [16, 32], strides = [1, 1]} : vector<16x384xf32> to vector<16x32xf32>
    %cst_9 = arith.constant dense<0.000000e+00> : vector<16x16xf32>
    %19 = tpu.matmul %16, %17, %cst_9 {dimension_numbers = #tpu.dot_dimension_numbers<[1], [1], [0], [0], [0, 0, 1, 0], [], []>} : vector<16x32xf32>, vector<16x32xf32>, vector<16x16xf32> -> vector<16x16xf32>
    %cst_10 = arith.constant 0.176776692 : f32
    %20 = vector.broadcast %cst_10 : f32 to vector<16x16xf32>
    %21 = arith.mulf %19, %20 : vector<16x16xf32>
    %cst_11 = arith.constant dense<0xFF800000> : vector<16xf32>
    %22 = vector.multi_reduction <maximumf>, %21, %cst_11 [1] : vector<16x16xf32> to vector<16xf32>
    %23 = vector.shape_cast %22 : vector<16xf32> to vector<16x1xf32>
    %24 = vector.broadcast %23 : vector<16x1xf32> to vector<16x16xf32>
    %25 = arith.subf %21, %24 : vector<16x16xf32>
    %26 = math.exp %25 : vector<16x16xf32>
    %cst_12 = arith.constant dense<0.000000e+00> : vector<16xf32>
    %27 = vector.multi_reduction <add>, %26, %cst_12 [1] : vector<16x16xf32> to vector<16xf32>
    %28 = vector.shape_cast %27 : vector<16xf32> to vector<16x1xf32>
    %29 = tpu.reciprocal %28 : vector<16x1xf32> -> vector<16x1xf32>
    %30 = vector.broadcast %29 : vector<16x1xf32> to vector<16x16xf32>
    %31 = arith.mulf %26, %30 : vector<16x16xf32>
    %cst_13 = arith.constant dense<0.000000e+00> : vector<16x128xf32>
    %32 = tpu.matmul %31, %12, %cst_13 {dimension_numbers = #tpu.dot_dimension_numbers<[1], [0], [0], [1], [0, 0, 1, 1], [], []>} : vector<16x16xf32>, vector<16x128xf32>, vector<16x128xf32> -> vector<16x128xf32>
    %c0_14 = arith.constant 0 : index
    %c0_15 = arith.constant 0 : index
    %c0_16 = arith.constant 0 : index
    %c0_17 = arith.constant 0 : index
    %33 = vector.load %arg7[%c0_14, %c0_15, %c0_16, %c0_17] : memref<1x4x16x128xf32, #tpu.memory_space<vmem>>, vector<1x1x16x128xf32>
    %34 = vector.shape_cast %33 : vector<1x1x16x128xf32> to vector<16x128xf32>
    %35 = vector.shape_cast %32 : vector<16x128xf32> to vector<1x1x16x128xf32>
    tpu.vector_store %arg7[%c0_14, %c0_15, %c0_16, %c0_17], %35 {strides = array<i32>} : memref<1x4x16x128xf32, #tpu.memory_space<vmem>>, vector<1x1x16x128xf32>,
    %cst_18 = arith.constant dense<0.000000e+00> : vector<16x32xf32>
    %36 = tpu.matmul %31, %18, %cst_18 {dimension_numbers = #tpu.dot_dimension_numbers<[1], [0], [0], [1], [0, 0, 1, 1], [], []>} : vector<16x16xf32>, vector<16x32xf32>, vector<16x32xf32> -> vector<16x32xf32>
    %c0_19 = arith.constant 0 : index
    %c0_20 = arith.constant 0 : index
    %37 = vector.load %arg8[%c0_19, %c0_20] : memref<16x128xf32, #tpu.memory_space<vmem>>, vector<16x32xf32>
    tpu.vector_store %arg8[%c0_19, %c0_20], %36 {strides = array<i32>} : memref<16x128xf32, #tpu.memory_space<vmem>>, vector<16x32xf32>,
    %38 = vector.extract_strided_slice %7 {offsets = [0, 32], sizes = [16, 32], strides = [1, 1]} : vector<16x384xf32> to vector<16x32xf32>
    %39 = vector.extract_strided_slice %7 {offsets = [0, 160], sizes = [16, 32], strides = [1, 1]} : vector<16x384xf32> to vector<16x32xf32>
    %40 = vector.extract_strided_slice %7 {offsets = [0, 288], sizes = [16, 32], strides = [1, 1]} : vector<16x384xf32> to vector<16x32xf32>
    %cst_21 = arith.constant dense<0.000000e+00> : vector<16x16xf32>
    %41 = tpu.matmul %38, %39, %cst_21 {dimension_numbers = #tpu.dot_dimension_numbers<[1], [1], [0], [0], [0, 0, 1, 0], [], []>} : vector<16x32xf32>, vector<16x32xf32>, vector<16x16xf32> -> vector<16x16xf32>
    %cst_22 = arith.constant 0.176776692 : f32
    %42 = vector.broadcast %cst_22 : f32 to vector<16x16xf32>
    %43 = arith.mulf %41, %42 : vector<16x16xf32>
    %cst_23 = arith.constant dense<0xFF800000> : vector<16xf32>
    %44 = vector.multi_reduction <maximumf>, %43, %cst_23 [1] : vector<16x16xf32> to vector<16xf32>
    %45 = vector.shape_cast %44 : vector<16xf32> to vector<16x1xf32>
    %46 = vector.broadcast %45 : vector<16x1xf32> to vector<16x16xf32>
    %47 = arith.subf %43, %46 : vector<16x16xf32>
    %48 = math.exp %47 : vector<16x16xf32>
    %cst_24 = arith.constant dense<0.000000e+00> : vector<16xf32>
    %49 = vector.multi_reduction <add>, %48, %cst_24 [1] : vector<16x16xf32> to vector<16xf32>
    %50 = vector.shape_cast %49 : vector<16xf32> to vector<16x1xf32>
    %51 = tpu.reciprocal %50 : vector<16x1xf32> -> vector<16x1xf32>
    %52 = vector.broadcast %51 : vector<16x1xf32> to vector<16x16xf32>
    %53 = arith.mulf %48, %52 : vector<16x16xf32>
    %cst_25 = arith.constant dense<0.000000e+00> : vector<16x128xf32>
    %54 = tpu.matmul %53, %12, %cst_25 {dimension_numbers = #tpu.dot_dimension_numbers<[1], [0], [0], [1], [0, 0, 1, 1], [], []>} : vector<16x16xf32>, vector<16x128xf32>, vector<16x128xf32> -> vector<16x128xf32>
    %c0_26 = arith.constant 0 : index
    %c1 = arith.constant 1 : index
    %c0_27 = arith.constant 0 : index
    %c0_28 = arith.constant 0 : index
    %55 = vector.load %arg7[%c0_26, %c1, %c0_27, %c0_28] : memref<1x4x16x128xf32, #tpu.memory_space<vmem>>, vector<1x1x16x128xf32>
    %56 = vector.shape_cast %55 : vector<1x1x16x128xf32> to vector<16x128xf32>
    %57 = vector.shape_cast %54 : vector<16x128xf32> to vector<1x1x16x128xf32>
    tpu.vector_store %arg7[%c0_26, %c1, %c0_27, %c0_28], %57 {strides = array<i32>} : memref<1x4x16x128xf32, #tpu.memory_space<vmem>>, vector<1x1x16x128xf32>,
    %cst_29 = arith.constant dense<0.000000e+00> : vector<16x32xf32>
    %58 = tpu.matmul %53, %40, %cst_29 {dimension_numbers = #tpu.dot_dimension_numbers<[1], [0], [0], [1], [0, 0, 1, 1], [], []>} : vector<16x16xf32>, vector<16x32xf32>, vector<16x32xf32> -> vector<16x32xf32>
    %c0_30 = arith.constant 0 : index
    %c32 = arith.constant 32 : index
    %59 = vector.load %arg8[%c0_30, %c32] : memref<16x128xf32, #tpu.memory_space<vmem>>, vector<16x32xf32>
    tpu.vector_store %arg8[%c0_30, %c32], %58 {strides = array<i32>} : memref<16x128xf32, #tpu.memory_space<vmem>>, vector<16x32xf32>,
    %60 = vector.extract_strided_slice %7 {offsets = [0, 64], sizes = [16, 32], strides = [1, 1]} : vector<16x384xf32> to vector<16x32xf32>
    %61 = vector.extract_strided_slice %7 {offsets = [0, 192], sizes = [16, 32], strides = [1, 1]} : vector<16x384xf32> to vector<16x32xf32>
    %62 = vector.extract_strided_slice %7 {offsets = [0, 320], sizes = [16, 32], strides = [1, 1]} : vector<16x384xf32> to vector<16x32xf32>
    %cst_31 = arith.constant dense<0.000000e+00> : vector<16x16xf32>
    %63 = tpu.matmul %60, %61, %cst_31 {dimension_numbers = #tpu.dot_dimension_numbers<[1], [1], [0], [0], [0, 0, 1, 0], [], []>} : vector<16x32xf32>, vector<16x32xf32>, vector<16x16xf32> -> vector<16x16xf32>
    %cst_32 = arith.constant 0.176776692 : f32
    %64 = vector.broadcast %cst_32 : f32 to vector<16x16xf32>
    %65 = arith.mulf %63, %64 : vector<16x16xf32>
    %cst_33 = arith.constant dense<0xFF800000> : vector<16xf32>
    %66 = vector.multi_reduction <maximumf>, %65, %cst_33 [1] : vector<16x16xf32> to vector<16xf32>
    %67 = vector.shape_cast %66 : vector<16xf32> to vector<16x1xf32>
    %68 = vector.broadcast %67 : vector<16x1xf32> to vector<16x16xf32>
    %69 = arith.subf %65, %68 : vector<16x16xf32>
    %70 = math.exp %69 : vector<16x16xf32>
    %cst_34 = arith.constant dense<0.000000e+00> : vector<16xf32>
    %71 = vector.multi_reduction <add>, %70, %cst_34 [1] : vector<16x16xf32> to vector<16xf32>
    %72 = vector.shape_cast %71 : vector<16xf32> to vector<16x1xf32>
    %73 = tpu.reciprocal %72 : vector<16x1xf32> -> vector<16x1xf32>
    %74 = vector.broadcast %73 : vector<16x1xf32> to vector<16x16xf32>
    %75 = arith.mulf %70, %74 : vector<16x16xf32>
    %cst_35 = arith.constant dense<0.000000e+00> : vector<16x128xf32>
    %76 = tpu.matmul %75, %12, %cst_35 {dimension_numbers = #tpu.dot_dimension_numbers<[1], [0], [0], [1], [0, 0, 1, 1], [], []>} : vector<16x16xf32>, vector<16x128xf32>, vector<16x128xf32> -> vector<16x128xf32>
    %c0_36 = arith.constant 0 : index
    %c2 = arith.constant 2 : index
    %c0_37 = arith.constant 0 : index
    %c0_38 = arith.constant 0 : index
    %77 = vector.load %arg7[%c0_36, %c2, %c0_37, %c0_38] : memref<1x4x16x128xf32, #tpu.memory_space<vmem>>, vector<1x1x16x128xf32>
    %78 = vector.shape_cast %77 : vector<1x1x16x128xf32> to vector<16x128xf32>
    %79 = vector.shape_cast %76 : vector<16x128xf32> to vector<1x1x16x128xf32>
    tpu.vector_store %arg7[%c0_36, %c2, %c0_37, %c0_38], %79 {strides = array<i32>} : memref<1x4x16x128xf32, #tpu.memory_space<vmem>>, vector<1x1x16x128xf32>,
    %cst_39 = arith.constant dense<0.000000e+00> : vector<16x32xf32>
    %80 = tpu.matmul %75, %62, %cst_39 {dimension_numbers = #tpu.dot_dimension_numbers<[1], [0], [0], [1], [0, 0, 1, 1], [], []>} : vector<16x16xf32>, vector<16x32xf32>, vector<16x32xf32> -> vector<16x32xf32>
    %c0_40 = arith.constant 0 : index
    %c64 = arith.constant 64 : index
    %81 = vector.load %arg8[%c0_40, %c64] : memref<16x128xf32, #tpu.memory_space<vmem>>, vector<16x32xf32>
    tpu.vector_store %arg8[%c0_40, %c64], %80 {strides = array<i32>} : memref<16x128xf32, #tpu.memory_space<vmem>>, vector<16x32xf32>,
    %82 = vector.extract_strided_slice %7 {offsets = [0, 96], sizes = [16, 32], strides = [1, 1]} : vector<16x384xf32> to vector<16x32xf32>
    %83 = vector.extract_strided_slice %7 {offsets = [0, 224], sizes = [16, 32], strides = [1, 1]} : vector<16x384xf32> to vector<16x32xf32>
    %84 = vector.extract_strided_slice %7 {offsets = [0, 352], sizes = [16, 32], strides = [1, 1]} : vector<16x384xf32> to vector<16x32xf32>
    %cst_41 = arith.constant dense<0.000000e+00> : vector<16x16xf32>
    %85 = tpu.matmul %82, %83, %cst_41 {dimension_numbers = #tpu.dot_dimension_numbers<[1], [1], [0], [0], [0, 0, 1, 0], [], []>} : vector<16x32xf32>, vector<16x32xf32>, vector<16x16xf32> -> vector<16x16xf32>
    %cst_42 = arith.constant 0.176776692 : f32
    %86 = vector.broadcast %cst_42 : f32 to vector<16x16xf32>
    %87 = arith.mulf %85, %86 : vector<16x16xf32>
    %cst_43 = arith.constant dense<0xFF800000> : vector<16xf32>
    %88 = vector.multi_reduction <maximumf>, %87, %cst_43 [1] : vector<16x16xf32> to vector<16xf32>
    %89 = vector.shape_cast %88 : vector<16xf32> to vector<16x1xf32>
    %90 = vector.broadcast %89 : vector<16x1xf32> to vector<16x16xf32>
    %91 = arith.subf %87, %90 : vector<16x16xf32>
    %92 = math.exp %91 : vector<16x16xf32>
    %cst_44 = arith.constant dense<0.000000e+00> : vector<16xf32>
    %93 = vector.multi_reduction <add>, %92, %cst_44 [1] : vector<16x16xf32> to vector<16xf32>
    %94 = vector.shape_cast %93 : vector<16xf32> to vector<16x1xf32>
    %95 = tpu.reciprocal %94 : vector<16x1xf32> -> vector<16x1xf32>
    %96 = vector.broadcast %95 : vector<16x1xf32> to vector<16x16xf32>
    %97 = arith.mulf %92, %96 : vector<16x16xf32>
    %cst_45 = arith.constant dense<0.000000e+00> : vector<16x128xf32>
    %98 = tpu.matmul %97, %12, %cst_45 {dimension_numbers = #tpu.dot_dimension_numbers<[1], [0], [0], [1], [0, 0, 1, 1], [], []>} : vector<16x16xf32>, vector<16x128xf32>, vector<16x128xf32> -> vector<16x128xf32>
    %c0_46 = arith.constant 0 : index
    %c3 = arith.constant 3 : index
    %c0_47 = arith.constant 0 : index
    %c0_48 = arith.constant 0 : index
    %99 = vector.load %arg7[%c0_46, %c3, %c0_47, %c0_48] : memref<1x4x16x128xf32, #tpu.memory_space<vmem>>, vector<1x1x16x128xf32>
    %100 = vector.shape_cast %99 : vector<1x1x16x128xf32> to vector<16x128xf32>
    %101 = vector.shape_cast %98 : vector<16x128xf32> to vector<1x1x16x128xf32>
    tpu.vector_store %arg7[%c0_46, %c3, %c0_47, %c0_48], %101 {strides = array<i32>} : memref<1x4x16x128xf32, #tpu.memory_space<vmem>>, vector<1x1x16x128xf32>,
    %cst_49 = arith.constant dense<0.000000e+00> : vector<16x32xf32>
    %102 = tpu.matmul %97, %84, %cst_49 {dimension_numbers = #tpu.dot_dimension_numbers<[1], [0], [0], [1], [0, 0, 1, 1], [], []>} : vector<16x16xf32>, vector<16x32xf32>, vector<16x32xf32> -> vector<16x32xf32>
    %c0_50 = arith.constant 0 : index
    %c96 = arith.constant 96 : index
    %103 = vector.load %arg8[%c0_50, %c96] : memref<16x128xf32, #tpu.memory_space<vmem>>, vector<16x32xf32>
    tpu.vector_store %arg8[%c0_50, %c96], %102 {strides = array<i32>} : memref<16x128xf32, #tpu.memory_space<vmem>>, vector<16x32xf32>,
    %c0_51 = arith.constant 0 : index
    %c0_52 = arith.constant 0 : index
    %104 = vector.load %arg8[%c0_51, %c0_52] : memref<16x128xf32, #tpu.memory_space<vmem>>, vector<16x128xf32>
    %cst_53 = arith.constant dense<0.000000e+00> : vector<16x128xf32>
    %105 = tpu.matmul %104, %13, %cst_53 {dimension_numbers = #tpu.dot_dimension_numbers<[1], [0], [0], [1], [0, 0, 1, 1], [], []>} : vector<16x128xf32>, vector<128x128xf32>, vector<16x128xf32> -> vector<16x128xf32>
    %106 = vector.shape_cast %15 : vector<128xf32> to vector<1x128xf32>
    %107 = vector.broadcast %106 : vector<1x128xf32> to vector<16x128xf32>
    %108 = arith.addf %105, %107 : vector<16x128xf32>
    %c0_54 = arith.constant 0 : index
    %c0_55 = arith.constant 0 : index
    %109 = vector.load %arg6[%c0_54, %c0_55] : memref<16x128xf32, #tpu.memory_space<vmem>>, vector<16x128xf32>
    tpu.vector_store %arg6[%c0_54, %c0_55], %108 {strides = array<i32>} : memref<16x128xf32, #tpu.memory_space<vmem>>, vector<16x128xf32>,
    return
  }
  func.func @transform_0(%arg0: i32) -> (i32, i32) {
    %c0_i32 = arith.constant 0 : i32
    %c0_i32_0 = arith.constant 0 : i32
    return %arg0, %c0_i32 : i32, i32
  }
  func.func @transform_1(%arg0: i32) -> (i32, i32) {
    %c0_i32 = arith.constant 0 : i32
    %c0_i32_0 = arith.constant 0 : i32
    %c0_i32_1 = arith.constant 0 : i32
    return %c0_i32, %c0_i32_0 : i32, i32
  }
  func.func @transform_2(%arg0: i32) -> (i32, i32) {
    %c0_i32 = arith.constant 0 : i32
    %c0_i32_0 = arith.constant 0 : i32
    %c0_i32_1 = arith.constant 0 : i32
    return %c0_i32, %c0_i32_0 : i32, i32
  }
  func.func @transform_3(%arg0: i32) -> (i32, i32) {
    %c0_i32 = arith.constant 0 : i32
    %c0_i32_0 = arith.constant 0 : i32
    %c0_i32_1 = arith.constant 0 : i32
    return %c0_i32, %c0_i32_0 : i32, i32
  }
  func.func @transform_4(%arg0: i32) -> (i32, i32) {
    %c0_i32 = arith.constant 0 : i32
    %c0_i32_0 = arith.constant 0 : i32
    %c0_i32_1 = arith.constant 0 : i32
    return %c0_i32, %c0_i32_0 : i32, i32
  }
  func.func @transform_5(%arg0: i32) -> (i32, i32) {
    %c0_i32 = arith.constant 0 : i32
    %c0_i32_0 = arith.constant 0 : i32
    return %arg0, %c0_i32 : i32, i32
  }
  func.func @transform_6(%arg0: i32) -> (i32, i32, i32, i32) {
    %c0_i32 = arith.constant 0 : i32
    %c0_i32_0 = arith.constant 0 : i32
    %c0_i32_1 = arith.constant 0 : i32
    %c0_i32_2 = arith.constant 0 : i32
    return %arg0, %c0_i32, %c0_i32_0, %c0_i32_1 : i32, i32, i32, i32
  }
}

</mosaic_0001>

<llo_original>
// kernel: tpu_custom_call.1
$region0: #{tpu_custom_call.1}
  #allocation0 [shape = 'u32[]', space=smem, size = 0x4, offset = 0x4, fixed_abs, tag = 'smem constant byte address 0x4 - core index']
  #allocation1 [shape = 'u32[144,128]{1,0:T(1,128)}', space=vmem, size = 0x12000, scoped, tag = 'internal scratch']
  #allocation2 [shape = 'f32[16,128]{1,0:T(8,128)}', space=vmem, size = 0x2000, scoped, tag = 'scratch operand']
  %s0 = inlined_call_operand.hbm [shape: f32[32,128], index: 0, kind: input, shape index: {}]
  %s1 = inlined_call_operand.hbm [shape: f32[128,384], index: 1, kind: input, shape index: {}]
  %s2 = inlined_call_operand.vmem [shape: f32[1,384], index: 2, kind: input, shape index: {}]
  %s3 = inlined_call_operand.hbm [shape: f32[128,128], index: 3, kind: input, shape index: {}]
  %s4 = inlined_call_operand.vmem [shape: f32[1,128], index: 4, kind: input, shape index: {}]
  %s5 = inlined_call_operand.hbm [shape: f32[32,128], index: 5, kind: output, shape index: {0}]
  %s6 = inlined_call_operand.hbm [shape: f32[2,4,16,128], index: 6, kind: output, shape index: {1}]
  %7 = xla_tuple %s5, %s6
  %s8 = sld [smem:[#allocation0]]
  $region73: #{tpu_custom_call.1} parent=0
    _
  %s10 = ssub.s32 1, %s8
  %s11 = scalar_select 0, %s10, %s8
  $region1: #{tpu_custom_call.1} parent=0
    #allocation3 [shape = 'u8[16384]{0}', space=vmem, size = 0x4000, scoped, tag = 'input window, operand 0']
    #allocation4 [shape = 's32[2]{0}', space=sflag, size = 0x8, scoped, tag = 'scoped memory for tpu_custom_call.1']
    #allocation5 [shape = 's32[2]{0}', space=sflag, size = 0x8, scoped, tag = 'scoped memory for tpu_custom_call.1']
    #allocation6 [shape = 'u8[196608]{0}', space=vmem, size = 0x30000, scoped, tag = 'input window, operand 1, single buffered']
    #allocation7 [shape = 's32[1]{0}', space=sflag, size = 0x4, scoped, tag = 'scoped memory for tpu_custom_call.1']
    #allocation8 [shape = 'u8[65536]{0}', space=vmem, size = 0x10000, scoped, tag = 'input window, operand 3, single buffered']
    #allocation9 [shape = 'u8[16384]{0}', space=vmem, size = 0x4000, scoped, tag = 'output window, operand 0']
    #allocation10 [shape = 'u8[65536]{0}', space=vmem, size = 0x10000, scoped, tag = 'output window, operand 1']
    #allocation11 [shape = 's32[2]{0}', space=sflag, size = 0x8, scoped, tag = 'scoped memory for tpu_custom_call.1']
    %12 = vsyncpa [#allocation4], 0
    %s13 = scalar_lea.sflag [#allocation4], 1
    %14 = vsyncpa %s13, 0
    %15 = vsyncpa [#allocation7], 0
    %16 = vsyncpa [#allocation5], 0
    %s17 = scalar_lea.sflag [#allocation5], 1
    %18 = vsyncpa %s17, 0
    %19 = vsyncpa [#allocation11], 0
    %s20 = scalar_lea.sflag [#allocation11], 1
    %21 = vsyncpa %s20, 0
    loop: start=0, step=1, limit=4
    $region2: #{tpu_custom_call.1} parent=1 // loop_pre_header
      _
    $region3: #{tpu_custom_call.1} parent=1 // loop_header
      %s23 = sphi 0, %s27
      %p24 = scmp.ge.s32.totalorder %s23, 4
      %s33 = sphi 0, %s35
      %s36 = sphi 0, %s33
      %s37 = sphi 0, %s36
      %s53 = sphi 0, %s37
      %s57 = sphi 0, %s57
      %s59 = sphi 0, %s57
      %s60 = sphi 0, %s59
      %s74 = sphi 0, %s60
      %s78 = sphi 0, %s78
      %s80 = sphi 0, %s78
      %s81 = sphi 0, %s80
      %s95 = sphi 0, %s81
      %s99 = sphi 0, %s99
      %s101 = sphi 0, %s99
      %s102 = sphi 0, %s101
      %s116 = sphi 0, %s102
      %s120 = sphi 0, %s120
      %s122 = sphi 0, %s120
      %s123 = sphi 0, %s122
      %s137 = sphi 0, %s123
      %s143 = sphi 0, %s145
      %s146 = sphi 0, %s143
      %s147 = sphi 0, %s146
      %s163 = sphi 0, %s147
      %s169 = sphi 0, %s171
      %s172 = sphi 0, %s169
      %s173 = sphi 0, %s172
      %s189 = sphi 0, %s173
    $region4: #{tpu_custom_call.1} parent=1 // loop_header_branch
      %26 = sbr.rel (%p24) target = $region8
    $region5: #{tpu_custom_call.1} parent=1 // loop_body
      %s28 = ssub.s32 %s23, 1
      %s29 = ssub.s32 %s23, 2
      %s30 = sadd.s32 %s23, 1
      %s31 = ssub.s32 %s23, %s30
      %p32 = scmp.eq.s32.totalorder %s31, 0
      %s34 = sadd.s32 %s33, 1
      %s35 = scalar_select %p32, %s33, %s34
      %p38 = pneg %p32
      %p39 = scmp.eq.s32.totalorder %s23, 1
      %p40 = por %p38, %p39
      %p41 = scmp.ne.s32.totalorder %s33, %s36
      %p42 = scmp.eq.s32.totalorder %s23, 0
      %p43 = por %p41, %p42
      %p44 = scmp.ne.s32.totalorder %s33, %s36
      %p45 = scmp.eq.s32.totalorder %s28, 1
      %p46 = por %p44, %p45
      %p47 = scmp.ne.s32.totalorder %s36, %s37
      %p48 = scmp.eq.s32.totalorder %s28, 0
      %p49 = por %p47, %p48
      %p50 = scmp.ne.s32.totalorder %s36, %s37
      %p51 = scmp.eq.s32.totalorder %s29, 1
      %p52 = por %p50, %p51
      %p54 = scmp.ne.s32.totalorder %s37, %s53
      %p55 = scmp.eq.s32.totalorder %s29, 0
      %p56 = por %p54, %p55
      %s58 = sadd.s32 %s57, 1
      %p61 = scmp.eq.s32.totalorder %s23, 1
      %p62 = scmp.ne.s32.totalorder %s57, %s59
      %p63 = scmp.eq.s32.totalorder %s23, 0
      %p64 = por %p62, %p63
      %p65 = scmp.ne.s32.totalorder %s57, %s59
      %p66 = scmp.eq.s32.totalorder %s28, 1
      %p67 = por %p65, %p66
      %p68 = scmp.ne.s32.totalorder %s59, %s60
      %p69 = scmp.eq.s32.totalorder %s28, 0
      %p70 = por %p68, %p69
      %p71 = scmp.ne.s32.totalorder %s59, %s60
      %p72 = scmp.eq.s32.totalorder %s29, 1
      %p73 = por %p71, %p72
      %p75 = scmp.ne.s32.totalorder %s60, %s74
      %p76 = scmp.eq.s32.totalorder %s29, 0
      %p77 = por %p75, %p76
      %s79 = sadd.s32 %s78, 1
      %p82 = scmp.eq.s32.totalorder %s23, 1
      %p83 = scmp.ne.s32.totalorder %s78, %s80
      %p84 = scmp.eq.s32.totalorder %s23, 0
      %p85 = por %p83, %p84
      %p86 = scmp.ne.s32.totalorder %s78, %s80
      %p87 = scmp.eq.s32.totalorder %s28, 1
      %p88 = por %p86, %p87
      %p89 = scmp.ne.s32.totalorder %s80, %s81
      %p90 = scmp.eq.s32.totalorder %s28, 0
      %p91 = por %p89, %p90
      %p92 = scmp.ne.s32.totalorder %s80, %s81
      %p93 = scmp.eq.s32.totalorder %s29, 1
      %p94 = por %p92, %p93
      %p96 = scmp.ne.s32.totalorder %s81, %s95
      %p97 = scmp.eq.s32.totalorder %s29, 0
      %p98 = por %p96, %p97
      %s100 = sadd.s32 %s99, 1
      %p103 = scmp.eq.s32.totalorder %s23, 1
      %p104 = scmp.ne.s32.totalorder %s99, %s101
      %p105 = scmp.eq.s32.totalorder %s23, 0
      %p106 = por %p104, %p105
      %p107 = scmp.ne.s32.totalorder %s99, %s101
      %p108 = scmp.eq.s32.totalorder %s28, 1
      %p109 = por %p107, %p108
      %p110 = scmp.ne.s32.totalorder %s101, %s102
      %p111 = scmp.eq.s32.totalorder %s28, 0
      %p112 = por %p110, %p111
      %p113 = scmp.ne.s32.totalorder %s101, %s102
      %p114 = scmp.eq.s32.totalorder %s29, 1
      %p115 = por %p113, %p114
      %p117 = scmp.ne.s32.totalorder %s102, %s116
      %p118 = scmp.eq.s32.totalorder %s29, 0
      %p119 = por %p117, %p118
      %s121 = sadd.s32 %s120, 1
      %p124 = scmp.eq.s32.totalorder %s23, 1
      %p125 = scmp.ne.s32.totalorder %s120, %s122
      %p126 = scmp.eq.s32.totalorder %s23, 0
      %p127 = por %p125, %p126
      %p128 = scmp.ne.s32.totalorder %s120, %s122
      %p129 = scmp.eq.s32.totalorder %s28, 1
      %p130 = por %p128, %p129
      %p131 = scmp.ne.s32.totalorder %s122, %s123
      %p132 = scmp.eq.s32.totalorder %s28, 0
      %p133 = por %p131, %p132
      %p134 = scmp.ne.s32.totalorder %s122, %s123
      %p135 = scmp.eq.s32.totalorder %s29, 1
      %p136 = por %p134, %p135
      %p138 = scmp.ne.s32.totalorder %s123, %s137
      %p139 = scmp.eq.s32.totalorder %s29, 0
      %p140 = por %p138, %p139
      %s141 = ssub.s32 %s23, %s30
      %p142 = scmp.eq.s32.totalorder %s141, 0
      %s144 = sadd.s32 %s143, 1
      %s145 = scalar_select %p142, %s143, %s144
      %p148 = pneg %p142
      %p149 = scmp.eq.s32.totalorder %s23, 1
      %p150 = por %p148, %p149
      %p151 = scmp.ne.s32.totalorder %s143, %s146
      %p152 = scmp.eq.s32.totalorder %s23, 0
      %p153 = por %p151, %p152
      %p154 = scmp.ne.s32.totalorder %s143, %s146
      %p155 = scmp.eq.s32.totalorder %s28, 1
      %p156 = por %p154, %p155
      %p157 = scmp.ne.s32.totalorder %s146, %s147
      %p158 = scmp.eq.s32.totalorder %s28, 0
      %p159 = por %p157, %p158
      %p160 = scmp.ne.s32.totalorder %s146, %s147
      %p161 = scmp.eq.s32.totalorder %s29, 1
      %p162 = por %p160, %p161
      %p164 = scmp.ne.s32.totalorder %s147, %s163
      %p165 = scmp.eq.s32.totalorder %s29, 0
      %p166 = por %p164, %p165
      %s167 = ssub.s32 %s23, %s30
      %p168 = scmp.eq.s32.totalorder %s167, 0
      %s170 = sadd.s32 %s169, 1
      %s171 = scalar_select %p168, %s169, %s170
      %p174 = pneg %p168
      %p175 = scmp.eq.s32.totalorder %s23, 1
      %p176 = por %p174, %p175
      %p177 = scmp.ne.s32.totalorder %s169, %s172
      %p178 = scmp.eq.s32.totalorder %s23, 0
      %p179 = por %p177, %p178
      %p180 = scmp.ne.s32.totalorder %s169, %s172
      %p181 = scmp.eq.s32.totalorder %s28, 1
      %p182 = por %p180, %p181
      %p183 = scmp.ne.s32.totalorder %s172, %s173
      %p184 = scmp.eq.s32.totalorder %s28, 0
      %p185 = por %p183, %p184
      %p186 = scmp.ne.s32.totalorder %s172, %s173
      %p187 = scmp.eq.s32.totalorder %s29, 1
      %p188 = por %p186, %p187
      %p190 = scmp.ne.s32.totalorder %s173, %s189
      %p191 = scmp.eq.s32.totalorder %s29, 0
      %p192 = por %p190, %p191
      %p193 = scmp.le.s32.totalorder 1, %s23
      %p194 = scmp.lt.s32.totalorder %s23, 3
      %p195 = pnand %p193, %p194
      %p196 = pneg %p195
      // Predicated region
      $region9: #{tpu_custom_call.1} parent=5 // pred_check
        _
      $region10: #{tpu_custom_call.1} parent=5 // pred_check_branch
        %198 = sbr.rel (%p195) target = $region12
      $region11: #{tpu_custom_call.1} parent=5 // pred_region
        %s199 = ssub.s32 %s23, 1
        // Predicated region
        $region13: #{tpu_custom_call.1} parent=11 // pred_check
          %p200 = pneg %p70
        $region14: #{tpu_custom_call.1} parent=11 // pred_check_branch
          %202 = sbr.rel (%p200) target = $region16
        $region15: #{tpu_custom_call.1} parent=11 // pred_region
          %s204 = ssub.s32 6144, 6144
          %205 = vsyncadd [#allocation7], %s204
          %s206 = sshll.u32 [#allocation6], 4
          %s207 = int_to_ptr.vmem [resolvable:$true] %s206
          %212 = dma.hbm_to_vmem [thread:$0]  %s1, 6144, %s207, [#allocation7], 384, 384, 24
        $region16: #{tpu_custom_call.1} parent=11 // pred_fallthru
          _
        // Predicated region
        $region17: #{tpu_custom_call.1} parent=11 // pred_check
          %p213 = pneg %p91
        $region18: #{tpu_custom_call.1} parent=11 // pred_check_branch
          %215 = sbr.rel (%p213) target = $region20
        $region19: #{tpu_custom_call.1} parent=11 // pred_region
          _
        $region20: #{tpu_custom_call.1} parent=11 // pred_fallthru
          _
        // Predicated region
        $region21: #{tpu_custom_call.1} parent=11 // pred_check
          %p216 = pneg %p112
        $region22: #{tpu_custom_call.1} parent=11 // pred_check_branch
          %218 = sbr.rel (%p216) target = $region24
        $region23: #{tpu_custom_call.1} parent=11 // pred_region
          %s220 = ssub.s32 2048, 2048
          %221 = vsyncadd [#allocation7], %s220
          %s222 = sshll.u32 [#allocation8], 4
          %s223 = int_to_ptr.vmem [resolvable:$true] %s222
          %228 = dma.hbm_to_vmem [thread:$0]  %s3, 2048, %s223, [#allocation7], 128, 128, 8
        $region24: #{tpu_custom_call.1} parent=11 // pred_fallthru
          _
        // Predicated region
        $region25: #{tpu_custom_call.1} parent=11 // pred_check
          %p229 = pneg %p133
        $region26: #{tpu_custom_call.1} parent=11 // pred_check_branch
          %231 = sbr.rel (%p229) target = $region28
        $region27: #{tpu_custom_call.1} parent=11 // pred_region
          _
        $region28: #{tpu_custom_call.1} parent=11 // pred_fallthru
          _
      $region12: #{tpu_custom_call.1} parent=5 // pred_fallthru
        _
      %p232 = scmp.lt.s32.totalorder %s23, 2
      // Predicated region
      $region29: #{tpu_custom_call.1} parent=5 // pred_check
        %p233 = pneg %p232
      $region30: #{tpu_custom_call.1} parent=5 // pred_check_branch
        %235 = sbr.rel (%p233) target = $region32
      $region31: #{tpu_custom_call.1} parent=5 // pred_region
        // Predicated region
        $region33: #{tpu_custom_call.1} parent=31 // pred_check
          %p236 = pneg %p43
        $region34: #{tpu_custom_call.1} parent=31 // pred_check_branch
          %238 = sbr.rel (%p236) target = $region36
        $region35: #{tpu_custom_call.1} parent=31 // pred_region
          %s239 = sand.u32 %s33, 1
          %s240 = scalar_lea.sflag [#allocation4], %s239
          %s241 = sand.u32 %s33, 1
          %s242 = smul.addr %s241, 16
          %s243 = scalar_lea.vmem [#allocation3], %s242
          %s244 = smul.u32 2, %s23
          %s246 = ssub.s32 256, 256
          %247 = vsyncadd %s240, %s246
          %s248 = smul.addr %s244, 128
          %s249 = scalar_lea.hbm %s0, %s248
          %s250 = sshll.u32 %s243, 4
          %s251 = int_to_ptr.vmem [resolvable:$true] %s250
          %256 = dma.hbm_to_vmem [thread:$0]  %s249, 256, %s251, %s240, 128, 128, 8
        $region36: #{tpu_custom_call.1} parent=31 // pred_fallthru
          _
      $region32: #{tpu_custom_call.1} parent=5 // pred_fallthru
        _
      %p257 = scmp.le.s32.totalorder 1, %s23
      %p258 = scmp.lt.s32.totalorder %s23, 3
      %p259 = pnand %p257, %p258
      %p260 = pneg %p259
      // Predicated region
      $region37: #{tpu_custom_call.1} parent=5 // pred_check
        _
      $region38: #{tpu_custom_call.1} parent=5 // pred_check_branch
        %262 = sbr.rel (%p259) target = $region40
      $region39: #{tpu_custom_call.1} parent=5 // pred_region
        %s263 = ssub.s32 %s23, 1
        %s264 = sand.u32 %s36, 1
        %s265 = scalar_lea.sflag [#allocation4], %s264
        %s266 = sand.u32 %s36, 1
        %s267 = smul.addr %s266, 16
        %s268 = scalar_lea.vmem [#allocation3], %s267
        // Predicated region
        $region41: #{tpu_custom_call.1} parent=39 // pred_check
          %p269 = pneg %p49
        $region42: #{tpu_custom_call.1} parent=39 // pred_check_branch
          %271 = sbr.rel (%p269) target = $region44
        $region43: #{tpu_custom_call.1} parent=39 // pred_region
          %272 = dma.done %s265, 256
        $region44: #{tpu_custom_call.1} parent=39 // pred_fallthru
          _
        // Predicated region
        $region45: #{tpu_custom_call.1} parent=39 // pred_check
          %p273 = pneg %p70
        $region46: #{tpu_custom_call.1} parent=39 // pred_check_branch
          %275 = sbr.rel (%p273) target = $region48
        $region47: #{tpu_custom_call.1} parent=39 // pred_region
          %276 = dma.done [#allocation7], 6144
        $region48: #{tpu_custom_call.1} parent=39 // pred_fallthru
          _
        // Predicated region
        $region49: #{tpu_custom_call.1} parent=39 // pred_check
          %p277 = pneg %p112
        $region50: #{tpu_custom_call.1} parent=39 // pred_check_branch
          %279 = sbr.rel (%p277) target = $region52
        $region51: #{tpu_custom_call.1} parent=39 // pred_region
          %280 = dma.done [#allocation7], 2048
        $region52: #{tpu_custom_call.1} parent=39 // pred_fallthru
          _
        %s281 = sand.u32 %s36, 1
        %s282 = scalar_lea.sflag [#allocation4], %s281
        %s283 = sand.u32 %s36, 1
        %s284 = smul.addr %s283, 16
        %s285 = scalar_lea.vmem [#allocation3], %s284
        %p286 = pneg %p49
        %p287 = pneg %p46
        %p288 = pneg %p70
        %p289 = pneg %p67
        %p290 = pneg %p91
        %p291 = pneg %p88
        %p292 = pneg %p112
        %p293 = pneg %p109
        %p294 = pneg %p133
        %p295 = pneg %p130
        %p296 = pneg %p159
        %p297 = pneg %p156
        %s298 = sand.u32 %s146, 1
        %s299 = scalar_lea.sflag [#allocation5], %s298
        %s300 = sand.u32 %s146, 1
        %s301 = smul.addr %s300, 16
        %s302 = scalar_lea.vmem [#allocation9], %s301
        %p303 = pneg %p185
        %p304 = pneg %p182
        %s305 = sand.u32 %s172, 1
        %s306 = scalar_lea.sflag [#allocation11], %s305
        %s307 = sand.u32 %s172, 1
        %s308 = smul.addr %s307, 64
        %s309 = scalar_lea.vmem [#allocation10], %s308
        %s310 = smul.u32 2, %s28
        %s311 = smul.u32 2, %s28
        %v312 = vld [vmem:[%s268] sm:$0xff]
        %v313 = vld [vmem:[%s268 + $0x8] sm:$0xff]
        %v314 = vld [vmem:[#allocation6] sm:$0xff]
        %v315 = vld [vmem:[#allocation6 + $0x8] sm:$0xff]
        %v316 = vld [vmem:[#allocation6 + $0x10] sm:$0xff]
        %v317 = vld [vmem:[#allocation6 + $0x18] sm:$0xff]
        %v318 = vld [vmem:[#allocation6 + $0x20] sm:$0xff]
        %v319 = vld [vmem:[#allocation6 + $0x28] sm:$0xff]
        %v320 = vld [vmem:[#allocation6 + $0x30] sm:$0xff]
        %v321 = vld [vmem:[#allocation6 + $0x38] sm:$0xff]
        %v322 = vld [vmem:[#allocation6 + $0x40] sm:$0xff]
        %v323 = vld [vmem:[#allocation6 + $0x48] sm:$0xff]
        %v324 = vld [vmem:[#allocation6 + $0x50] sm:$0xff]
        %v325 = vld [vmem:[#allocation6 + $0x58] sm:$0xff]
        %v326 = vld [vmem:[#allocation6 + $0x60] sm:$0xff]
        %v327 = vld [vmem:[#allocation6 + $0x68] sm:$0xff]
        %v328 = vld [vmem:[#allocation6 + $0x70] sm:$0xff]
        %v329 = vld [vmem:[#allocation6 + $0x78] sm:$0xff]
        %v330 = vld [vmem:[#allocation6 + $0x80] sm:$0xff]
        %v331 = vld [vmem:[#allocation6 + $0x88] sm:$0xff]
        %v332 = vld [vmem:[#allocation6 + $0x90] sm:$0xff]
        %v333 = vld [vmem:[#allocation6 + $0x98] sm:$0xff]
        %v334 = vld [vmem:[#allocation6 + $0xa0] sm:$0xff]
        %v335 = vld [vmem:[#allocation6 + $0xa8] sm:$0xff]
        %v336 = vld [vmem:[#allocation6 + $0xb0] sm:$0xff]
        %v337 = vld [vmem:[#allocation6 + $0xb8] sm:$0xff]
        %v338 = vld [vmem:[#allocation6 + $0xc0] sm:$0xff]
        %v339 = vld [vmem:[#allocation6 + $0xc8] sm:$0xff]
        %v340 = vld [vmem:[#allocation6 + $0xd0] sm:$0xff]
        %v341 = vld [vmem:[#allocation6 + $0xd8] sm:$0xff]
        %v342 = vld [vmem:[#allocation6 + $0xe0] sm:$0xff]
        %v343 = vld [vmem:[#allocation6 + $0xe8] sm:$0xff]
        %v344 = vld [vmem:[#allocation6 + $0xf0] sm:$0xff]
        %v345 = vld [vmem:[#allocation6 + $0xf8] sm:$0xff]
        %v346 = vld [vmem:[#allocation6 + $0x100] sm:$0xff]
        %v347 = vld [vmem:[#allocation6 + $0x108] sm:$0xff]
        %v348 = vld [vmem:[#allocation6 + $0x110] sm:$0xff]
        %v349 = vld [vmem:[#allocation6 + $0x118] sm:$0xff]
        %v350 = vld [vmem:[#allocation6 + $0x120] sm:$0xff]
        %v351 = vld [vmem:[#allocation6 + $0x128] sm:$0xff]
        %v352 = vld [vmem:[#allocation6 + $0x130] sm:$0xff]
        %v353 = vld [vmem:[#allocation6 + $0x138] sm:$0xff]
        %v354 = vld [vmem:[#allocation6 + $0x140] sm:$0xff]
        %v355 = vld [vmem:[#allocation6 + $0x148] sm:$0xff]
        %v356 = vld [vmem:[#allocation6 + $0x150] sm:$0xff]
        %v357 = vld [vmem:[#allocation6 + $0x158] sm:$0xff]
        %v358 = vld [vmem:[#allocation6 + $0x160] sm:$0xff]
        %v359 = vld [vmem:[#allocation6 + $0x168] sm:$0xff]
        %v360 = vld [vmem:[#allocation6 + $0x170] sm:$0xff]
        %v361 = vld [vmem:[#allocation6 + $0x178] sm:$0xff]
        %v362 = vld [vmem:[%s2] sm:$0x7]
        %v364 = vlaneseq
        %v365 = vshrl.u32 %v364, 7
        %v366 = vsub.s32 0, %v365
        %v367 = vrot.slane %v362, %v366
        %v368 = vlaneseq
        %v369 = vshrl.u32 %v368, 7
        %v370 = vsub.s32 1, %v369
        %v371 = vrot.slane %v362, %v370
        %v372 = vlaneseq
        %v373 = vshrl.u32 %v372, 7
        %v374 = vsub.s32 2, %v373
        %v375 = vrot.slane %v362, %v374
        %379 = vmatprep.subr.mxu0 %v315
        %380 = vmatpush1.msra.mxu0 %v314
        %381 = vmatprep.subr.mxu0 %v318
        %382 = vmatpush1.msra.mxu0 %v317
        %383 = vmatprep.subr.mxu0 %v321
        %384 = vmatpush1.msra.mxu0 %v320
        %385 = vmatprep.subr.mxu0 %v324
        %386 = vmatpush1.msra.mxu0 %v323
        %387 = vmatprep.subr.mxu0 %v327
        %388 = vmatpush1.msra.mxu0 %v326
        %389 = vmatprep.subr.mxu0 %v330
        %390 = vmatpush1.msra.mxu0 %v329
        %391 = vmatprep.subr.mxu0 %v333
        %392 = vmatpush1.msra.mxu0 %v332
        %393 = vmatprep.subr.mxu0 %v336
        %394 = vmatpush1.msra.mxu0 %v335
        %395 = vmatprep.subr.mxu0 %v339
        %396 = vmatpush1.msra.mxu0 %v338
        %397 = vmatprep.subr.mxu0 %v342
        %398 = vmatpush1.msra.mxu0 %v341
        %399 = vmatprep.subr.mxu0 %v345
        %400 = vmatpush1.msra.mxu0 %v344
        %401 = vmatprep.subr.mxu0 %v348
        %402 = vmatpush1.msra.mxu0 %v347
        %403 = vmatprep.subr.mxu0 %v351
        %404 = vmatpush1.msra.mxu0 %v350
        %405 = vmatprep.subr.mxu0 %v354
        %406 = vmatpush1.msra.mxu0 %v353
        %407 = vmatprep.subr.mxu0 %v357
        %408 = vmatpush1.msra.mxu0 %v356
        %409 = vmatprep.subr.mxu0 %v360
        %410 = vmatpush1.msra.mxu0 %v359
        %411 = vmatprep.subr.mxu0 0.0
        %412 = vmatpush1.msra.mxu0 0.0
        %413 = vmatprep.subr.mxu0 0.0
        %414 = vmatpush1.msra.mxu0 0.0
        %415 = vmatprep.subr.mxu0 0.0
        %416 = vmatpush1.msra.mxu0 0.0
        %417 = vmatprep.subr.mxu0 0.0
        %418 = vmatpush1.msra.mxu0 0.0
        %419 = vmatprep.subr.mxu0 0.0
        %420 = vmatpush1.msra.mxu0 0.0
        %421 = vmatprep.subr.mxu0 0.0
        %422 = vmatpush1.msra.mxu0 0.0
        %423 = vmatprep.subr.mxu0 0.0
        %424 = vmatpush1.msra.mxu0 0.0
        %425 = vmatprep.subr.mxu0 0.0
        %426 = vmatpush1.msra.mxu0 0.0
        %427 = vmatprep.subr.mxu0 0.0
        %428 = vmatpush1.msra.mxu0 0.0
        %429 = vmatprep.subr.mxu0 0.0
        %430 = vmatpush1.msra.mxu0 0.0
        %431 = vmatprep.subr.mxu0 0.0
        %432 = vmatpush1.msra.mxu0 0.0
        %433 = vmatprep.subr.mxu0 0.0
        %434 = vmatpush1.msra.mxu0 0.0
        %435 = vmatprep.subr.mxu0 0.0
        %436 = vmatpush1.msra.mxu0 0.0
        %437 = vmatprep.subr.mxu0 0.0
        %438 = vmatpush1.msra.mxu0 0.0
        %439 = vmatprep.subr.mxu0 0.0
        %440 = vmatpush1.msra.mxu0 0.0
        %441 = vmatprep.subr.mxu0 0.0
        %442 = vmatpush1.msra.mxu0 0.0
        %443 = vmatprep.mubr.f32.mxu0 0.0
        %444 = vmatmul.mubr.f32.gmra.mrb[0].mxu0 %v312
        %v445 = vpop.f32.mrb[0].mxu0
        %v446 = vadd.f32 %v367, %v445
        %v447 = vpop.f32.mrb[0].mxu0
        %v448 = vadd.f32 %v371, %v447
        %449 = vmatprep.mubr.f32.mxu0 0.0
        %450 = vmatmul.mubr.f32.gmra.mrb[0].mxu0 %v313
        %v451 = vpop.f32.mrb[0].mxu0
        %v452 = vadd.f32 %v367, %v451
        %v453 = vpop.f32.mrb[0].mxu0
        %v454 = vadd.f32 %v371, %v453
        %455 = vdwg.mxu0
        %456 = vmatprep.subr.mxu0 0.0
        %457 = vmatpush1.msra.mxu0 %v316
        %458 = vmatprep.subr.mxu0 0.0
        %459 = vmatpush1.msra.mxu0 %v319
        %460 = vmatprep.subr.mxu0 0.0
        %461 = vmatpush1.msra.mxu0 %v322
        %462 = vmatprep.subr.mxu0 0.0
        %463 = vmatpush1.msra.mxu0 %v325
        %464 = vmatprep.subr.mxu0 0.0
        %465 = vmatpush1.msra.mxu0 %v328
        %466 = vmatprep.subr.mxu0 0.0
        %467 = vmatpush1.msra.mxu0 %v331
        %468 = vmatprep.subr.mxu0 0.0
        %469 = vmatpush1.msra.mxu0 %v334
        %470 = vmatprep.subr.mxu0 0.0
        %471 = vmatpush1.msra.mxu0 %v337
        %472 = vmatprep.subr.mxu0 0.0
        %473 = vmatpush1.msra.mxu0 %v340
        %474 = vmatprep.subr.mxu0 0.0
        %475 = vmatpush1.msra.mxu0 %v343
        %476 = vmatprep.subr.mxu0 0.0
        %477 = vmatpush1.msra.mxu0 %v346
        %478 = vmatprep.subr.mxu0 0.0
        %479 = vmatpush1.msra.mxu0 %v349
        %480 = vmatprep.subr.mxu0 0.0
        %481 = vmatpush1.msra.mxu0 %v352
        %482 = vmatprep.subr.mxu0 0.0
        %483 = vmatpush1.msra.mxu0 %v355
        %484 = vmatprep.subr.mxu0 0.0
        %485 = vmatpush1.msra.mxu0 %v358
        %486 = vmatprep.subr.mxu0 0.0
        %487 = vmatpush1.msra.mxu0 %v361
        %488 = vmatprep.subr.mxu0 0.0
        %489 = vmatpush1.msra.mxu0 0.0
        %490 = vmatprep.subr.mxu0 0.0
        %491 = vmatpush1.msra.mxu0 0.0
        %492 = vmatprep.subr.mxu0 0.0
        %493 = vmatpush1.msra.mxu0 0.0
        %494 = vmatprep.subr.mxu0 0.0
        %495 = vmatpush1.msra.mxu0 0.0
        %496 = vmatprep.subr.mxu0 0.0
        %497 = vmatpush1.msra.mxu0 0.0
        %498 = vmatprep.subr.mxu0 0.0
        %499 = vmatpush1.msra.mxu0 0.0
        %500 = vmatprep.subr.mxu0 0.0
        %501 = vmatpush1.msra.mxu0 0.0
        %502 = vmatprep.subr.mxu0 0.0
        %503 = vmatpush1.msra.mxu0 0.0
        %504 = vmatprep.subr.mxu0 0.0
        %505 = vmatpush1.msra.mxu0 0.0
        %506 = vmatprep.subr.mxu0 0.0
        %507 = vmatpush1.msra.mxu0 0.0
        %508 = vmatprep.subr.mxu0 0.0
        %509 = vmatpush1.msra.mxu0 0.0
        %510 = vmatprep.subr.mxu0 0.0
        %511 = vmatpush1.msra.mxu0 0.0
        %512 = vmatprep.subr.mxu0 0.0
        %513 = vmatpush1.msra.mxu0 0.0
        %514 = vmatprep.subr.mxu0 0.0
        %515 = vmatpush1.msra.mxu0 0.0
        %516 = vmatprep.subr.mxu0 0.0
        %517 = vmatpush1.msra.mxu0 0.0
        %518 = vmatprep.subr.mxu0 0.0
        %519 = vmatpush1.msra.mxu0 0.0
        %520 = vmatprep.mubr.f32.mxu0 0.0
        %521 = vmatmul.mubr.f32.gmra.mrb[0].mxu0 %v312
        %v522 = vpop.f32.mrb[0].mxu0
        %v523 = vadd.f32 %v375, %v522
        %v524 = vpop.f32.mrb[0].mxu0
        %525 = vmatprep.mubr.f32.mxu0 0.0
        %526 = vmatmul.mubr.f32.gmra.mrb[0].mxu0 %v313
        %v527 = vpop.f32.mrb[0].mxu0
        %v528 = vadd.f32 %v375, %v527
        %v529 = vpop.f32.mrb[0].mxu0
        %530 = vdwg.mxu0
        %v531 = vlaneseq
        %v532 = vshrl.u32 %v531, 7
        %v533 = vadd.s32 %v532, 8
        %v534 = vlaneseq
        %v535 = vand.u32 %v534, 127
        %vm536 = vcmp.eq.s32.totalorder %v532, %v535
        %vm537 = vcmp.eq.s32.totalorder %v533, %v535
        %v538 = vsel %vm536, 1, 0
        %v539 = vsel %vm537, 1, 0
        %v540 = vcvt.s32.f32 %v538
        %v541 = vcvt.s32.f32 %v539
        %v542 = vld [vmem:[#allocation8] sm:$0xff]
        %v543 = vld [vmem:[#allocation8 + $0x8] sm:$0xff]
        %v544 = vld [vmem:[#allocation8 + $0x10] sm:$0xff]
        %v545 = vld [vmem:[#allocation8 + $0x18] sm:$0xff]
        %v546 = vld [vmem:[#allocation8 + $0x20] sm:$0xff]
        %v547 = vld [vmem:[#allocation8 + $0x28] sm:$0xff]
        %v548 = vld [vmem:[#allocation8 + $0x30] sm:$0xff]
        %v549 = vld [vmem:[#allocation8 + $0x38] sm:$0xff]
        %v550 = vld [vmem:[#allocation8 + $0x40] sm:$0xff]
        %v551 = vld [vmem:[#allocation8 + $0x48] sm:$0xff]
        %v552 = vld [vmem:[#allocation8 + $0x50] sm:$0xff]
        %v553 = vld [vmem:[#allocation8 + $0x58] sm:$0xff]
        %v554 = vld [vmem:[#allocation8 + $0x60] sm:$0xff]
        %v555 = vld [vmem:[#allocation8 + $0x68] sm:$0xff]
        %v556 = vld [vmem:[#allocation8 + $0x70] sm:$0xff]
        %v557 = vld [vmem:[#allocation8 + $0x78] sm:$0xff]
        %v558 = vld [vmem:[%s4] sm:$0x1]
        %vm559 = vcmask 261120
        %v561 = vsel %vm559, %v446, 0
        %v564 = vsel %vm559, %v452, 0
        %v567 = vsel %vm559, %v448, 0
        %v570 = vsel %vm559, %v454, 0
        %572 = vmatprep.subr.mxu0 0.0
        %573 = vmatpush1.xpose.msra.mxu0 %v567
        %574 = vmatprep.subr.mxu0 0.0
        %575 = vmatpush1.xpose.msra.mxu0 %v570
        %576 = vmatprep.subr.mxu0 0.0
        %577 = vmatpush1.xpose.msra.mxu0 0.0
        %578 = vmatprep.subr.mxu0 0.0
        %579 = vmatpush1.xpose.msra.mxu0 0.0
        %580 = vmatprep.subr.mxu0 0.0
        %581 = vmatpush1.xpose.msra.mxu0 0.0
        %582 = vmatprep.subr.mxu0 0.0
        %583 = vmatpush1.xpose.msra.mxu0 0.0
        %584 = vmatprep.subr.mxu0 0.0
        %585 = vmatpush1.xpose.msra.mxu0 0.0
        %586 = vmatprep.subr.mxu0 0.0
        %587 = vmatpush1.xpose.msra.mxu0 0.0
        %588 = vmatprep.subr.mxu0 0.0
        %589 = vmatpush1.xpose.msra.mxu0 0.0
        %590 = vmatprep.subr.mxu0 0.0
        %591 = vmatpush1.xpose.msra.mxu0 0.0
        %592 = vmatprep.subr.mxu0 0.0
        %593 = vmatpush1.xpose.msra.mxu0 0.0
        %594 = vmatprep.subr.mxu0 0.0
        %595 = vmatpush1.xpose.msra.mxu0 0.0
        %596 = vmatprep.subr.mxu0 0.0
        %597 = vmatpush1.xpose.msra.mxu0 0.0
        %598 = vmatprep.subr.mxu0 0.0
        %599 = vmatpush1.xpose.msra.mxu0 0.0
        %600 = vmatprep.subr.mxu0 0.0
        %601 = vmatpush1.xpose.msra.mxu0 0.0
        %602 = vmatprep.subr.mxu0 0.0
        %603 = vmatpush1.xpose.msra.mxu0 0.0
        %604 = vmatprep.subr.mxu0 0.0
        %605 = vmatpush1.xpose.msra.mxu0 0.0
        %606 = vmatprep.subr.mxu0 0.0
        %607 = vmatpush1.xpose.msra.mxu0 0.0
        %608 = vmatprep.subr.mxu0 0.0
        %609 = vmatpush1.xpose.msra.mxu0 0.0
        %610 = vmatprep.subr.mxu0 0.0
        %611 = vmatpush1.xpose.msra.mxu0 0.0
        %612 = vmatprep.subr.mxu0 0.0
        %613 = vmatpush1.xpose.msra.mxu0 0.0
        %614 = vmatprep.subr.mxu0 0.0
        %615 = vmatpush1.xpose.msra.mxu0 0.0
        %616 = vmatprep.subr.mxu0 0.0
        %617 = vmatpush1.xpose.msra.mxu0 0.0
        %618 = vmatprep.subr.mxu0 0.0
        %619 = vmatpush1.xpose.msra.mxu0 0.0
        %620 = vmatprep.subr.mxu0 0.0
        %621 = vmatpush1.xpose.msra.mxu0 0.0
        %622 = vmatprep.subr.mxu0 0.0
        %623 = vmatpush1.xpose.msra.mxu0 0.0
        %624 = vmatprep.subr.mxu0 0.0
        %625 = vmatpush1.xpose.msra.mxu0 0.0
        %626 = vmatprep.subr.mxu0 0.0
        %627 = vmatpush1.xpose.msra.mxu0 0.0
        %628 = vmatprep.subr.mxu0 0.0
        %629 = vmatpush1.xpose.msra.mxu0 0.0
        %630 = vmatprep.subr.mxu0 0.0
        %631 = vmatpush1.xpose.msra.mxu0 0.0
        %632 = vmatprep.subr.mxu0 0.0
        %633 = vmatpush1.xpose.msra.mxu0 0.0
        %634 = vmatprep.subr.mxu0 0.0
        %635 = vmatpush1.xpose.msra.mxu0 0.0
        %636 = vmatprep.mubr.f32.mxu0 0.0
        %637 = vmatmul.mubr.f32.gmra.mrb[0].mxu0 %v561
        %v638 = vpop.f32.mrb[0].mxu0
        %v639 = vadd.f32 0.0, %v638
        %v640 = vpop.f32.mrb[0].mxu0
        %641 = vmatprep.mubr.f32.mxu0 0.0
        %642 = vmatmul.mubr.f32.gmra.mrb[0].mxu0 %v564
        %v643 = vpop.f32.mrb[0].mxu0
        %v644 = vadd.f32 0.0, %v643
        %v645 = vpop.f32.mrb[0].mxu0
        %646 = vdwg.mxu0
        %v647 = vmul.f32 %v639, 0.17677669
        %v648 = vmul.f32 %v644, 0.17677669
        %vm649 = vcmask 130048
        %v650 = vsel %vm649, %v647, -inf
        %651 = vmax.xlane.f32.xlu0 %v650
        %v652 = vpop.xlane.xlu0 %651
        %v653 = vsel %vm649, %v648, -inf
        %654 = vmax.xlane.f32.xlu0 %v653
        %v655 = vpop.xlane.xlu0 %654
        %v656 = vsub.f32 %v647, %v652
        %v657 = vsub.f32 %v648, %v655
        %v658 = vmul.f32 %v656, 1.442695
        %v659 = vpow.pop %v658
        %v660 = vmul.f32 %v657, 1.442695
        %v661 = vpow.pop %v660
        %v662 = vsel %vm649, %v659, 0.0
        %663 = vadd.xlane.f32.xlu0 %v662
        %v664 = vpop.xlane.xlu0 %663
        %v665 = vsel %vm649, %v661, 0.0
        %666 = vadd.xlane.f32.xlu0 %v665
        %v667 = vpop.xlane.xlu0 %666
        %v668 = vrcp.pop %v664
        %v669 = vrcp.pop %v667
        %v670 = vmul.f32 %v659, %v668
        %v671 = vmul.f32 %v661, %v669
        %v673 = vsel %vm649, %v670, 0
        %v676 = vsel %vm649, %v671, 0
        %678 = vmatprep.subr.mxu0 0.0
        %679 = vmatpush1.msra.mxu0 %v540
        %680 = vmatprep.subr.mxu0 0.0
        %681 = vmatpush1.msra.mxu0 %v541
        %682 = vmatprep.subr.mxu0 0.0
        %683 = vmatpush1.msra.mxu0 0.0
        %684 = vmatprep.subr.mxu0 0.0
        %685 = vmatpush1.msra.mxu0 0.0
        %686 = vmatprep.subr.mxu0 0.0
        %687 = vmatpush1.msra.mxu0 0.0
        %688 = vmatprep.subr.mxu0 0.0
        %689 = vmatpush1.msra.mxu0 0.0
        %690 = vmatprep.subr.mxu0 0.0
        %691 = vmatpush1.msra.mxu0 0.0
        %692 = vmatprep.subr.mxu0 0.0
        %693 = vmatpush1.msra.mxu0 0.0
        %694 = vmatprep.subr.mxu0 0.0
        %695 = vmatpush1.msra.mxu0 0.0
        %696 = vmatprep.subr.mxu0 0.0
        %697 = vmatpush1.msra.mxu0 0.0
        %698 = vmatprep.subr.mxu0 0.0
        %699 = vmatpush1.msra.mxu0 0.0
        %700 = vmatprep.subr.mxu0 0.0
        %701 = vmatpush1.msra.mxu0 0.0
        %702 = vmatprep.subr.mxu0 0.0
        %703 = vmatpush1.msra.mxu0 0.0
        %704 = vmatprep.subr.mxu0 0.0
        %705 = vmatpush1.msra.mxu0 0.0
        %706 = vmatprep.subr.mxu0 0.0
        %707 = vmatpush1.msra.mxu0 0.0
        %708 = vmatprep.subr.mxu0 0.0
        %709 = vmatpush1.msra.mxu0 0.0
        %710 = vmatprep.subr.mxu0 0.0
        %711 = vmatpush1.msra.mxu0 0.0
        %712 = vmatprep.subr.mxu0 0.0
        %713 = vmatpush1.msra.mxu0 0.0
        %714 = vmatprep.subr.mxu0 0.0
        %715 = vmatpush1.msra.mxu0 0.0
        %716 = vmatprep.subr.mxu0 0.0
        %717 = vmatpush1.msra.mxu0 0.0
        %718 = vmatprep.subr.mxu0 0.0
        %719 = vmatpush1.msra.mxu0 0.0
        %720 = vmatprep.subr.mxu0 0.0
        %721 = vmatpush1.msra.mxu0 0.0
        %722 = vmatprep.subr.mxu0 0.0
        %723 = vmatpush1.msra.mxu0 0.0
        %724 = vmatprep.subr.mxu0 0.0
        %725 = vmatpush1.msra.mxu0 0.0
        %726 = vmatprep.subr.mxu0 0.0
        %727 = vmatpush1.msra.mxu0 0.0
        %728 = vmatprep.subr.mxu0 0.0
        %729 = vmatpush1.msra.mxu0 0.0
        %730 = vmatprep.subr.mxu0 0.0
        %731 = vmatpush1.msra.mxu0 0.0
        %732 = vmatprep.subr.mxu0 0.0
        %733 = vmatpush1.msra.mxu0 0.0
        %734 = vmatprep.subr.mxu0 0.0
        %735 = vmatpush1.msra.mxu0 0.0
        %736 = vmatprep.subr.mxu0 0.0
        %737 = vmatpush1.msra.mxu0 0.0
        %738 = vmatprep.subr.mxu0 0.0
        %739 = vmatpush1.msra.mxu0 0.0
        %740 = vmatprep.subr.mxu0 0.0
        %741 = vmatpush1.msra.mxu0 0.0
        %742 = vmatprep.mubr.f32.mxu0 0.0
        %743 = vmatmul.mubr.f32.gmra.mrb[0].mxu0 %v673
        %v744 = vpop.f32.mrb[0].mxu0
        %v745 = vadd.f32 0.0, %v744
        %v746 = vpop.f32.mrb[0].mxu0
        %747 = vmatprep.mubr.f32.mxu0 0.0
        %748 = vmatmul.mubr.f32.gmra.mrb[0].mxu0 %v676
        %v749 = vpop.f32.mrb[0].mxu0
        %v750 = vadd.f32 0.0, %v749
        %v751 = vpop.f32.mrb[0].mxu0
        %752 = vdwg.mxu0
        %753 = vst [vmem:[%s309] sm:$0xff] %v745
        %754 = vst [vmem:[%s309 + $0x8] sm:$0xff] %v750
        %755 = vmatprep.subr.mxu0 0.0
        %756 = vmatpush1.msra.mxu0 %v523
        %757 = vmatprep.subr.mxu0 0.0
        %758 = vmatpush1.msra.mxu0 %v528
        %759 = vmatprep.subr.mxu0 0.0
        %760 = vmatpush1.msra.mxu0 0.0
        %761 = vmatprep.subr.mxu0 0.0
        %762 = vmatpush1.msra.mxu0 0.0
        %763 = vmatprep.subr.mxu0 0.0
        %764 = vmatpush1.msra.mxu0 0.0
        %765 = vmatprep.subr.mxu0 0.0
        %766 = vmatpush1.msra.mxu0 0.0
        %767 = vmatprep.subr.mxu0 0.0
        %768 = vmatpush1.msra.mxu0 0.0
        %769 = vmatprep.subr.mxu0 0.0
        %770 = vmatpush1.msra.mxu0 0.0
        %771 = vmatprep.subr.mxu0 0.0
        %772 = vmatpush1.msra.mxu0 0.0
        %773 = vmatprep.subr.mxu0 0.0
        %774 = vmatpush1.msra.mxu0 0.0
        %775 = vmatprep.subr.mxu0 0.0
        %776 = vmatpush1.msra.mxu0 0.0
        %777 = vmatprep.subr.mxu0 0.0
        %778 = vmatpush1.msra.mxu0 0.0
        %779 = vmatprep.subr.mxu0 0.0
        %780 = vmatpush1.msra.mxu0 0.0
        %781 = vmatprep.subr.mxu0 0.0
        %782 = vmatpush1.msra.mxu0 0.0
        %783 = vmatprep.subr.mxu0 0.0
        %784 = vmatpush1.msra.mxu0 0.0
        %785 = vmatprep.subr.mxu0 0.0
        %786 = vmatpush1.msra.mxu0 0.0
        %787 = vmatprep.subr.mxu0 0.0
        %788 = vmatpush1.msra.mxu0 0.0
        %789 = vmatprep.subr.mxu0 0.0
        %790 = vmatpush1.msra.mxu0 0.0
        %791 = vmatprep.subr.mxu0 0.0
        %792 = vmatpush1.msra.mxu0 0.0
        %793 = vmatprep.subr.mxu0 0.0
        %794 = vmatpush1.msra.mxu0 0.0
        %795 = vmatprep.subr.mxu0 0.0
        %796 = vmatpush1.msra.mxu0 0.0
        %797 = vmatprep.subr.mxu0 0.0
        %798 = vmatpush1.msra.mxu0 0.0
        %799 = vmatprep.subr.mxu0 0.0
        %800 = vmatpush1.msra.mxu0 0.0
        %801 = vmatprep.subr.mxu0 0.0
        %802 = vmatpush1.msra.mxu0 0.0
        %803 = vmatprep.subr.mxu0 0.0
        %804 = vmatpush1.msra.mxu0 0.0
        %805 = vmatprep.subr.mxu0 0.0
        %806 = vmatpush1.msra.mxu0 0.0
        %807 = vmatprep.subr.mxu0 0.0
        %808 = vmatpush1.msra.mxu0 0.0
        %809 = vmatprep.subr.mxu0 0.0
        %810 = vmatpush1.msra.mxu0 0.0
        %811 = vmatprep.subr.mxu0 0.0
        %812 = vmatpush1.msra.mxu0 0.0
        %813 = vmatprep.subr.mxu0 0.0
        %814 = vmatpush1.msra.mxu0 0.0
        %815 = vmatprep.subr.mxu0 0.0
        %816 = vmatpush1.msra.mxu0 0.0
        %817 = vmatprep.subr.mxu0 0.0
        %818 = vmatpush1.msra.mxu0 0.0
        %819 = vmatprep.mubr.f32.mxu0 0.0
        %820 = vmatmul.mubr.f32.gmra.mrb[0].mxu0 %v673
        %v821 = vpop.f32.mrb[0].mxu0
        %v822 = vadd.f32 0.0, %v821
        %v823 = vpop.f32.mrb[0].mxu0
        %824 = vmatprep.mubr.f32.mxu0 0.0
        %825 = vmatmul.mubr.f32.gmra.mrb[0].mxu0 %v676
        %v826 = vpop.f32.mrb[0].mxu0
        %v827 = vadd.f32 0.0, %v826
        %v828 = vpop.f32.mrb[0].mxu0
        %829 = vdwg.mxu0
        %830 = vst.msk [vmem:[#allocation2] sm:$0xff] %vm559, %v822
        %831 = vst.msk [vmem:[#allocation2 + $0x8] sm:$0xff] %vm559, %v827
        %832 = vrot.lane.b32.xlu0 %v446, 96
        %v833 = vpop.permute.xlu0 %832
        %834 = vrot.lane.b32.xlu0 %v452, 96
        %v835 = vpop.permute.xlu0 %834
        %836 = vrot.lane.b32.xlu0 %v448, 96
        %v837 = vpop.permute.xlu0 %836
        %838 = vrot.lane.b32.xlu0 %v454, 96
        %v839 = vpop.permute.xlu0 %838
        %v840 = vsel %vm559, %v833, 0
        %v842 = vsel %vm559, %v835, 0
        %v844 = vsel %vm559, %v837, 0
        %v846 = vsel %vm559, %v839, 0
        %848 = vmatprep.subr.mxu0 0.0
        %849 = vmatpush1.xpose.msra.mxu0 %v844
        %850 = vmatprep.subr.mxu0 0.0
        %851 = vmatpush1.xpose.msra.mxu0 %v846
        %852 = vmatprep.subr.mxu0 0.0
        %853 = vmatpush1.xpose.msra.mxu0 0.0
        %854 = vmatprep.subr.mxu0 0.0
        %855 = vmatpush1.xpose.msra.mxu0 0.0
        %856 = vmatprep.subr.mxu0 0.0
        %857 = vmatpush1.xpose.msra.mxu0 0.0
        %858 = vmatprep.subr.mxu0 0.0
        %859 = vmatpush1.xpose.msra.mxu0 0.0
        %860 = vmatprep.subr.mxu0 0.0
        %861 = vmatpush1.xpose.msra.mxu0 0.0
        %862 = vmatprep.subr.mxu0 0.0
        %863 = vmatpush1.xpose.msra.mxu0 0.0
        %864 = vmatprep.subr.mxu0 0.0
        %865 = vmatpush1.xpose.msra.mxu0 0.0
        %866 = vmatprep.subr.mxu0 0.0
        %867 = vmatpush1.xpose.msra.mxu0 0.0
        %868 = vmatprep.subr.mxu0 0.0
        %869 = vmatpush1.xpose.msra.mxu0 0.0
        %870 = vmatprep.subr.mxu0 0.0
        %871 = vmatpush1.xpose.msra.mxu0 0.0
        %872 = vmatprep.subr.mxu0 0.0
        %873 = vmatpush1.xpose.msra.mxu0 0.0
        %874 = vmatprep.subr.mxu0 0.0
        %875 = vmatpush1.xpose.msra.mxu0 0.0
        %876 = vmatprep.subr.mxu0 0.0
        %877 = vmatpush1.xpose.msra.mxu0 0.0
        %878 = vmatprep.subr.mxu0 0.0
        %879 = vmatpush1.xpose.msra.mxu0 0.0
        %880 = vmatprep.subr.mxu0 0.0
        %881 = vmatpush1.xpose.msra.mxu0 0.0
        %882 = vmatprep.subr.mxu0 0.0
        %883 = vmatpush1.xpose.msra.mxu0 0.0
        %884 = vmatprep.subr.mxu0 0.0
        %885 = vmatpush1.xpose.msra.mxu0 0.0
        %886 = vmatprep.subr.mxu0 0.0
        %887 = vmatpush1.xpose.msra.mxu0 0.0
        %888 = vmatprep.subr.mxu0 0.0
        %889 = vmatpush1.xpose.msra.mxu0 0.0
        %890 = vmatprep.subr.mxu0 0.0
        %891 = vmatpush1.xpose.msra.mxu0 0.0
        %892 = vmatprep.subr.mxu0 0.0
        %893 = vmatpush1.xpose.msra.mxu0 0.0
        %894 = vmatprep.subr.mxu0 0.0
        %895 = vmatpush1.xpose.msra.mxu0 0.0
        %896 = vmatprep.subr.mxu0 0.0
        %897 = vmatpush1.xpose.msra.mxu0 0.0
        %898 = vmatprep.subr.mxu0 0.0
        %899 = vmatpush1.xpose.msra.mxu0 0.0
        %900 = vmatprep.subr.mxu0 0.0
        %901 = vmatpush1.xpose.msra.mxu0 0.0
        %902 = vmatprep.subr.mxu0 0.0
        %903 = vmatpush1.xpose.msra.mxu0 0.0
        %904 = vmatprep.subr.mxu0 0.0
        %905 = vmatpush1.xpose.msra.mxu0 0.0
        %906 = vmatprep.subr.mxu0 0.0
        %907 = vmatpush1.xpose.msra.mxu0 0.0
        %908 = vmatprep.subr.mxu0 0.0
        %909 = vmatpush1.xpose.msra.mxu0 0.0
        %910 = vmatprep.subr.mxu0 0.0
        %911 = vmatpush1.xpose.msra.mxu0 0.0
        %912 = vmatprep.mubr.f32.mxu0 0.0
        %913 = vmatmul.mubr.f32.gmra.mrb[0].mxu0 %v840
        %v914 = vpop.f32.mrb[0].mxu0
        %v915 = vadd.f32 0.0, %v914
        %v916 = vpop.f32.mrb[0].mxu0
        %917 = vmatprep.mubr.f32.mxu0 0.0
        %918 = vmatmul.mubr.f32.gmra.mrb[0].mxu0 %v842
        %v919 = vpop.f32.mrb[0].mxu0
        %v920 = vadd.f32 0.0, %v919
        %v921 = vpop.f32.mrb[0].mxu0
        %922 = vdwg.mxu0
        %v923 = vmul.f32 %v915, 0.17677669
        %v924 = vmul.f32 %v920, 0.17677669
        %v925 = vsel %vm649, %v923, -inf
        %926 = vmax.xlane.f32.xlu0 %v925
        %v927 = vpop.xlane.xlu0 %926
        %v928 = vsel %vm649, %v924, -inf
        %929 = vmax.xlane.f32.xlu0 %v928
        %v930 = vpop.xlane.xlu0 %929
        %v931 = vsub.f32 %v923, %v927
        %v932 = vsub.f32 %v924, %v930
        %v933 = vmul.f32 %v931, 1.442695
        %v934 = vpow.pop %v933
        %v935 = vmul.f32 %v932, 1.442695
        %v936 = vpow.pop %v935
        %v937 = vsel %vm649, %v934, 0.0
        %938 = vadd.xlane.f32.xlu0 %v937
        %v939 = vpop.xlane.xlu0 %938
        %v940 = vsel %vm649, %v936, 0.0
        %941 = vadd.xlane.f32.xlu0 %v940
        %v942 = vpop.xlane.xlu0 %941
        %v943 = vrcp.pop %v939
        %v944 = vrcp.pop %v942
        %v945 = vmul.f32 %v934, %v943
        %v946 = vmul.f32 %v936, %v944
        %v948 = vsel %vm649, %v945, 0
        %v951 = vsel %vm649, %v946, 0
        %953 = vmatprep.subr.mxu0 0.0
        %954 = vmatpush1.msra.mxu0 %v540
        %955 = vmatprep.subr.mxu0 0.0
        %956 = vmatpush1.msra.mxu0 %v541
        %957 = vmatprep.subr.mxu0 0.0
        %958 = vmatpush1.msra.mxu0 0.0
        %959 = vmatprep.subr.mxu0 0.0
        %960 = vmatpush1.msra.mxu0 0.0
        %961 = vmatprep.subr.mxu0 0.0
        %962 = vmatpush1.msra.mxu0 0.0
        %963 = vmatprep.subr.mxu0 0.0
        %964 = vmatpush1.msra.mxu0 0.0
        %965 = vmatprep.subr.mxu0 0.0
        %966 = vmatpush1.msra.mxu0 0.0
        %967 = vmatprep.subr.mxu0 0.0
        %968 = vmatpush1.msra.mxu0 0.0
        %969 = vmatprep.subr.mxu0 0.0
        %970 = vmatpush1.msra.mxu0 0.0
        %971 = vmatprep.subr.mxu0 0.0
        %972 = vmatpush1.msra.mxu0 0.0
        %973 = vmatprep.subr.mxu0 0.0
        %974 = vmatpush1.msra.mxu0 0.0
        %975 = vmatprep.subr.mxu0 0.0
        %976 = vmatpush1.msra.mxu0 0.0
        %977 = vmatprep.subr.mxu0 0.0
        %978 = vmatpush1.msra.mxu0 0.0
        %979 = vmatprep.subr.mxu0 0.0
        %980 = vmatpush1.msra.mxu0 0.0
        %981 = vmatprep.subr.mxu0 0.0
        %982 = vmatpush1.msra.mxu0 0.0
        %983 = vmatprep.subr.mxu0 0.0
        %984 = vmatpush1.msra.mxu0 0.0
        %985 = vmatprep.subr.mxu0 0.0
        %986 = vmatpush1.msra.mxu0 0.0
        %987 = vmatprep.subr.mxu0 0.0
        %988 = vmatpush1.msra.mxu0 0.0
        %989 = vmatprep.subr.mxu0 0.0
        %990 = vmatpush1.msra.mxu0 0.0
        %991 = vmatprep.subr.mxu0 0.0
        %992 = vmatpush1.msra.mxu0 0.0
        %993 = vmatprep.subr.mxu0 0.0
        %994 = vmatpush1.msra.mxu0 0.0
        %995 = vmatprep.subr.mxu0 0.0
        %996 = vmatpush1.msra.mxu0 0.0
        %997 = vmatprep.subr.mxu0 0.0
        %998 = vmatpush1.msra.mxu0 0.0
        %999 = vmatprep.subr.mxu0 0.0
        %1000 = vmatpush1.msra.mxu0 0.0
        %1001 = vmatprep.subr.mxu0 0.0
        %1002 = vmatpush1.msra.mxu0 0.0
        %1003 = vmatprep.subr.mxu0 0.0
        %1004 = vmatpush1.msra.mxu0 0.0
        %1005 = vmatprep.subr.mxu0 0.0
        %1006 = vmatpush1.msra.mxu0 0.0
        %1007 = vmatprep.subr.mxu0 0.0
        %1008 = vmatpush1.msra.mxu0 0.0
        %1009 = vmatprep.subr.mxu0 0.0
        %1010 = vmatpush1.msra.mxu0 0.0
        %1011 = vmatprep.subr.mxu0 0.0
        %1012 = vmatpush1.msra.mxu0 0.0
        %1013 = vmatprep.subr.mxu0 0.0
        %1014 = vmatpush1.msra.mxu0 0.0
        %1015 = vmatprep.subr.mxu0 0.0
        %1016 = vmatpush1.msra.mxu0 0.0
        %1017 = vmatprep.mubr.f32.mxu0 0.0
        %1018 = vmatmul.mubr.f32.gmra.mrb[0].mxu0 %v948
        %v1019 = vpop.f32.mrb[0].mxu0
        %v1020 = vadd.f32 0.0, %v1019
        %v1021 = vpop.f32.mrb[0].mxu0
        %1022 = vmatprep.mubr.f32.mxu0 0.0
        %1023 = vmatmul.mubr.f32.gmra.mrb[0].mxu0 %v951
        %v1024 = vpop.f32.mrb[0].mxu0
        %v1025 = vadd.f32 0.0, %v1024
        %v1026 = vpop.f32.mrb[0].mxu0
        %1027 = vdwg.mxu0
        %s1028 = scalar_lea.vmem %s309, 16 [#allocation10]
        %1029 = vst [vmem:[%s1028] sm:$0xff] %v1020
        %1030 = vst [vmem:[%s1028 + $0x8] sm:$0xff] %v1025
        %1033 = vrot.lane.b32.xlu0 %v523, 96
        %v1034 = vpop.permute.xlu0 %1033
        %1035 = vrot.lane.b32.xlu0 %v528, 96
        %v1036 = vpop.permute.xlu0 %1035
        %1039 = vmatprep.subr.mxu0 0.0
        %1040 = vmatpush1.msra.mxu0 %v1034
        %1041 = vmatprep.subr.mxu0 0.0
        %1042 = vmatpush1.msra.mxu0 %v1036
        %1043 = vmatprep.subr.mxu0 0.0
        %1044 = vmatpush1.msra.mxu0 0.0
        %1045 = vmatprep.subr.mxu0 0.0
        %1046 = vmatpush1.msra.mxu0 0.0
        %1047 = vmatprep.subr.mxu0 0.0
        %1048 = vmatpush1.msra.mxu0 0.0
        %1049 = vmatprep.subr.mxu0 0.0
        %1050 = vmatpush1.msra.mxu0 0.0
        %1051 = vmatprep.subr.mxu0 0.0
        %1052 = vmatpush1.msra.mxu0 0.0
        %1053 = vmatprep.subr.mxu0 0.0
        %1054 = vmatpush1.msra.mxu0 0.0
        %1055 = vmatprep.subr.mxu0 0.0
        %1056 = vmatpush1.msra.mxu0 0.0
        %1057 = vmatprep.subr.mxu0 0.0
        %1058 = vmatpush1.msra.mxu0 0.0
        %1059 = vmatprep.subr.mxu0 0.0
        %1060 = vmatpush1.msra.mxu0 0.0
        %1061 = vmatprep.subr.mxu0 0.0
        %1062 = vmatpush1.msra.mxu0 0.0
        %1063 = vmatprep.subr.mxu0 0.0
        %1064 = vmatpush1.msra.mxu0 0.0
        %1065 = vmatprep.subr.mxu0 0.0
        %1066 = vmatpush1.msra.mxu0 0.0
        %1067 = vmatprep.subr.mxu0 0.0
        %1068 = vmatpush1.msra.mxu0 0.0
        %1069 = vmatprep.subr.mxu0 0.0
        %1070 = vmatpush1.msra.mxu0 0.0
        %1071 = vmatprep.subr.mxu0 0.0
        %1072 = vmatpush1.msra.mxu0 0.0
        %1073 = vmatprep.subr.mxu0 0.0
        %1074 = vmatpush1.msra.mxu0 0.0
        %1075 = vmatprep.subr.mxu0 0.0
        %1076 = vmatpush1.msra.mxu0 0.0
        %1077 = vmatprep.subr.mxu0 0.0
        %1078 = vmatpush1.msra.mxu0 0.0
        %1079 = vmatprep.subr.mxu0 0.0
        %1080 = vmatpush1.msra.mxu0 0.0
        %1081 = vmatprep.subr.mxu0 0.0
        %1082 = vmatpush1.msra.mxu0 0.0
        %1083 = vmatprep.subr.mxu0 0.0
        %1084 = vmatpush1.msra.mxu0 0.0
        %1085 = vmatprep.subr.mxu0 0.0
        %1086 = vmatpush1.msra.mxu0 0.0
        %1087 = vmatprep.subr.mxu0 0.0
        %1088 = vmatpush1.msra.mxu0 0.0
        %1089 = vmatprep.subr.mxu0 0.0
        %1090 = vmatpush1.msra.mxu0 0.0
        %1091 = vmatprep.subr.mxu0 0.0
        %1092 = vmatpush1.msra.mxu0 0.0
        %1093 = vmatprep.subr.mxu0 0.0
        %1094 = vmatpush1.msra.mxu0 0.0
        %1095 = vmatprep.subr.mxu0 0.0
        %1096 = vmatpush1.msra.mxu0 0.0
        %1097 = vmatprep.subr.mxu0 0.0
        %1098 = vmatpush1.msra.mxu0 0.0
        %1099 = vmatprep.subr.mxu0 0.0
        %1100 = vmatpush1.msra.mxu0 0.0
        %1101 = vmatprep.subr.mxu0 0.0
        %1102 = vmatpush1.msra.mxu0 0.0
        %1103 = vmatprep.mubr.f32.mxu0 0.0
        %1104 = vmatmul.mubr.f32.gmra.mrb[0].mxu0 %v948
        %v1105 = vpop.f32.mrb[0].mxu0
        %v1106 = vadd.f32 0.0, %v1105
        %v1107 = vpop.f32.mrb[0].mxu0
        %1108 = vmatprep.mubr.f32.mxu0 0.0
        %1109 = vmatmul.mubr.f32.gmra.mrb[0].mxu0 %v951
        %v1110 = vpop.f32.mrb[0].mxu0
        %v1111 = vadd.f32 0.0, %v1110
        %v1112 = vpop.f32.mrb[0].mxu0
        %1113 = vdwg.mxu0
        %1116 = vrot.lane.b32.xlu0 %v1106, 32
        %v1117 = vpop.permute.xlu0 %1116
        %1118 = vrot.lane.b32.xlu0 %v1111, 32
        %v1119 = vpop.permute.xlu0 %1118
        %vm1122 = vcmask 523520
        %1123 = vst.msk [vmem:[#allocation2] sm:$0xff] %vm1122, %v1117
        %1124 = vst.msk [vmem:[#allocation2 + $0x8] sm:$0xff] %vm1122, %v1119
        %1125 = vrot.lane.b32.xlu0 %v446, 64
        %v1126 = vpop.permute.xlu0 %1125
        %1127 = vrot.lane.b32.xlu0 %v452, 64
        %v1128 = vpop.permute.xlu0 %1127
        %1129 = vrot.lane.b32.xlu0 %v448, 64
        %v1130 = vpop.permute.xlu0 %1129
        %1131 = vrot.lane.b32.xlu0 %v454, 64
        %v1132 = vpop.permute.xlu0 %1131
        %v1133 = vsel %vm559, %v1126, 0
        %v1135 = vsel %vm559, %v1128, 0
        %v1137 = vsel %vm559, %v1130, 0
        %v1139 = vsel %vm559, %v1132, 0
        %1141 = vmatprep.subr.mxu0 0.0
        %1142 = vmatpush1.xpose.msra.mxu0 %v1137
        %1143 = vmatprep.subr.mxu0 0.0
        %1144 = vmatpush1.xpose.msra.mxu0 %v1139
        %1145 = vmatprep.subr.mxu0 0.0
        %1146 = vmatpush1.xpose.msra.mxu0 0.0
        %1147 = vmatprep.subr.mxu0 0.0
        %1148 = vmatpush1.xpose.msra.mxu0 0.0
        %1149 = vmatprep.subr.mxu0 0.0
        %1150 = vmatpush1.xpose.msra.mxu0 0.0
        %1151 = vmatprep.subr.mxu0 0.0
        %1152 = vmatpush1.xpose.msra.mxu0 0.0
        %1153 = vmatprep.subr.mxu0 0.0
        %1154 = vmatpush1.xpose.msra.mxu0 0.0
        %1155 = vmatprep.subr.mxu0 0.0
        %1156 = vmatpush1.xpose.msra.mxu0 0.0
        %1157 = vmatprep.subr.mxu0 0.0
        %1158 = vmatpush1.xpose.msra.mxu0 0.0
        %1159 = vmatprep.subr.mxu0 0.0
        %1160 = vmatpush1.xpose.msra.mxu0 0.0
        %1161 = vmatprep.subr.mxu0 0.0
        %1162 = vmatpush1.xpose.msra.mxu0 0.0
        %1163 = vmatprep.subr.mxu0 0.0
        %1164 = vmatpush1.xpose.msra.mxu0 0.0
        %1165 = vmatprep.subr.mxu0 0.0
        %1166 = vmatpush1.xpose.msra.mxu0 0.0
        %1167 = vmatprep.subr.mxu0 0.0
        %1168 = vmatpush1.xpose.msra.mxu0 0.0
        %1169 = vmatprep.subr.mxu0 0.0
        %1170 = vmatpush1.xpose.msra.mxu0 0.0
        %1171 = vmatprep.subr.mxu0 0.0
        %1172 = vmatpush1.xpose.msra.mxu0 0.0
        %1173 = vmatprep.subr.mxu0 0.0
        %1174 = vmatpush1.xpose.msra.mxu0 0.0
        %1175 = vmatprep.subr.mxu0 0.0
        %1176 = vmatpush1.xpose.msra.mxu0 0.0
        %1177 = vmatprep.subr.mxu0 0.0
        %1178 = vmatpush1.xpose.msra.mxu0 0.0
        %1179 = vmatprep.subr.mxu0 0.0
        %1180 = vmatpush1.xpose.msra.mxu0 0.0
        %1181 = vmatprep.subr.mxu0 0.0
        %1182 = vmatpush1.xpose.msra.mxu0 0.0
        %1183 = vmatprep.subr.mxu0 0.0
        %1184 = vmatpush1.xpose.msra.mxu0 0.0
        %1185 = vmatprep.subr.mxu0 0.0
        %1186 = vmatpush1.xpose.msra.mxu0 0.0
        %1187 = vmatprep.subr.mxu0 0.0
        %1188 = vmatpush1.xpose.msra.mxu0 0.0
        %1189 = vmatprep.subr.mxu0 0.0
        %1190 = vmatpush1.xpose.msra.mxu0 0.0
        %1191 = vmatprep.subr.mxu0 0.0
        %1192 = vmatpush1.xpose.msra.mxu0 0.0
        %1193 = vmatprep.subr.mxu0 0.0
        %1194 = vmatpush1.xpose.msra.mxu0 0.0
        %1195 = vmatprep.subr.mxu0 0.0
        %1196 = vmatpush1.xpose.msra.mxu0 0.0
        %1197 = vmatprep.subr.mxu0 0.0
        %1198 = vmatpush1.xpose.msra.mxu0 0.0
        %1199 = vmatprep.subr.mxu0 0.0
        %1200 = vmatpush1.xpose.msra.mxu0 0.0
        %1201 = vmatprep.subr.mxu0 0.0
        %1202 = vmatpush1.xpose.msra.mxu0 0.0
        %1203 = vmatprep.subr.mxu0 0.0
        %1204 = vmatpush1.xpose.msra.mxu0 0.0
        %1205 = vmatprep.mubr.f32.mxu0 0.0
        %1206 = vmatmul.mubr.f32.gmra.mrb[0].mxu0 %v1133
        %v1207 = vpop.f32.mrb[0].mxu0
        %v1208 = vadd.f32 0.0, %v1207
        %v1209 = vpop.f32.mrb[0].mxu0
        %1210 = vmatprep.mubr.f32.mxu0 0.0
        %1211 = vmatmul.mubr.f32.gmra.mrb[0].mxu0 %v1135
        %v1212 = vpop.f32.mrb[0].mxu0
        %v1213 = vadd.f32 0.0, %v1212
        %v1214 = vpop.f32.mrb[0].mxu0
        %1215 = vdwg.mxu0
        %v1216 = vmul.f32 %v1208, 0.17677669
        %v1217 = vmul.f32 %v1213, 0.17677669
        %v1218 = vsel %vm649, %v1216, -inf
        %1219 = vmax.xlane.f32.xlu0 %v1218
        %v1220 = vpop.xlane.xlu0 %1219
        %v1221 = vsel %vm649, %v1217, -inf
        %1222 = vmax.xlane.f32.xlu0 %v1221
        %v1223 = vpop.xlane.xlu0 %1222
        %v1224 = vsub.f32 %v1216, %v1220
        %v1225 = vsub.f32 %v1217, %v1223
        %v1226 = vmul.f32 %v1224, 1.442695
        %v1227 = vpow.pop %v1226
        %v1228 = vmul.f32 %v1225, 1.442695
        %v1229 = vpow.pop %v1228
        %v1230 = vsel %vm649, %v1227, 0.0
        %1231 = vadd.xlane.f32.xlu0 %v1230
        %v1232 = vpop.xlane.xlu0 %1231
        %v1233 = vsel %vm649, %v1229, 0.0
        %1234 = vadd.xlane.f32.xlu0 %v1233
        %v1235 = vpop.xlane.xlu0 %1234
        %v1236 = vrcp.pop %v1232
        %v1237 = vrcp.pop %v1235
        %v1238 = vmul.f32 %v1227, %v1236
        %v1239 = vmul.f32 %v1229, %v1237
        %v1241 = vsel %vm649, %v1238, 0
        %v1244 = vsel %vm649, %v1239, 0
        %1246 = vmatprep.subr.mxu0 0.0
        %1247 = vmatpush1.msra.mxu0 %v540
        %1248 = vmatprep.subr.mxu0 0.0
        %1249 = vmatpush1.msra.mxu0 %v541
        %1250 = vmatprep.subr.mxu0 0.0
        %1251 = vmatpush1.msra.mxu0 0.0
        %1252 = vmatprep.subr.mxu0 0.0
        %1253 = vmatpush1.msra.mxu0 0.0
        %1254 = vmatprep.subr.mxu0 0.0
        %1255 = vmatpush1.msra.mxu0 0.0
        %1256 = vmatprep.subr.mxu0 0.0
        %1257 = vmatpush1.msra.mxu0 0.0
        %1258 = vmatprep.subr.mxu0 0.0
        %1259 = vmatpush1.msra.mxu0 0.0
        %1260 = vmatprep.subr.mxu0 0.0
        %1261 = vmatpush1.msra.mxu0 0.0
        %1262 = vmatprep.subr.mxu0 0.0
        %1263 = vmatpush1.msra.mxu0 0.0
        %1264 = vmatprep.subr.mxu0 0.0
        %1265 = vmatpush1.msra.mxu0 0.0
        %1266 = vmatprep.subr.mxu0 0.0
        %1267 = vmatpush1.msra.mxu0 0.0
        %1268 = vmatprep.subr.mxu0 0.0
        %1269 = vmatpush1.msra.mxu0 0.0
        %1270 = vmatprep.subr.mxu0 0.0
        %1271 = vmatpush1.msra.mxu0 0.0
        %1272 = vmatprep.subr.mxu0 0.0
        %1273 = vmatpush1.msra.mxu0 0.0
        %1274 = vmatprep.subr.mxu0 0.0
        %1275 = vmatpush1.msra.mxu0 0.0
        %1276 = vmatprep.subr.mxu0 0.0
        %1277 = vmatpush1.msra.mxu0 0.0
        %1278 = vmatprep.subr.mxu0 0.0
        %1279 = vmatpush1.msra.mxu0 0.0
        %1280 = vmatprep.subr.mxu0 0.0
        %1281 = vmatpush1.msra.mxu0 0.0
        %1282 = vmatprep.subr.mxu0 0.0
        %1283 = vmatpush1.msra.mxu0 0.0
        %1284 = vmatprep.subr.mxu0 0.0
        %1285 = vmatpush1.msra.mxu0 0.0
        %1286 = vmatprep.subr.mxu0 0.0
        %1287 = vmatpush1.msra.mxu0 0.0
        %1288 = vmatprep.subr.mxu0 0.0
        %1289 = vmatpush1.msra.mxu0 0.0
        %1290 = vmatprep.subr.mxu0 0.0
        %1291 = vmatpush1.msra.mxu0 0.0
        %1292 = vmatprep.subr.mxu0 0.0
        %1293 = vmatpush1.msra.mxu0 0.0
        %1294 = vmatprep.subr.mxu0 0.0
        %1295 = vmatpush1.msra.mxu0 0.0
        %1296 = vmatprep.subr.mxu0 0.0
        %1297 = vmatpush1.msra.mxu0 0.0
        %1298 = vmatprep.subr.mxu0 0.0
        %1299 = vmatpush1.msra.mxu0 0.0
        %1300 = vmatprep.subr.mxu0 0.0
        %1301 = vmatpush1.msra.mxu0 0.0
        %1302 = vmatprep.subr.mxu0 0.0
        %1303 = vmatpush1.msra.mxu0 0.0
        %1304 = vmatprep.subr.mxu0 0.0
        %1305 = vmatpush1.msra.mxu0 0.0
        %1306 = vmatprep.subr.mxu0 0.0
        %1307 = vmatpush1.msra.mxu0 0.0
        %1308 = vmatprep.subr.mxu0 0.0
        %1309 = vmatpush1.msra.mxu0 0.0
        %1310 = vmatprep.mubr.f32.mxu0 0.0
        %1311 = vmatmul.mubr.f32.gmra.mrb[0].mxu0 %v1241
        %v1312 = vpop.f32.mrb[0].mxu0
        %v1313 = vadd.f32 0.0, %v1312
        %v1314 = vpop.f32.mrb[0].mxu0
        %1315 = vmatprep.mubr.f32.mxu0 0.0
        %1316 = vmatmul.mubr.f32.gmra.mrb[0].mxu0 %v1244
        %v1317 = vpop.f32.mrb[0].mxu0
        %v1318 = vadd.f32 0.0, %v1317
        %v1319 = vpop.f32.mrb[0].mxu0
        %1320 = vdwg.mxu0
        %s1321 = scalar_lea.vmem %s309, 32 [#allocation10]
        %1322 = vst [vmem:[%s1321] sm:$0xff] %v1313
        %1323 = vst [vmem:[%s1321 + $0x8] sm:$0xff] %v1318
        %1324 = vrot.lane.b32.xlu0 %v523, 64
        %v1325 = vpop.permute.xlu0 %1324
        %1326 = vrot.lane.b32.xlu0 %v528, 64
        %v1327 = vpop.permute.xlu0 %1326
        %1330 = vmatprep.subr.mxu0 0.0
        %1331 = vmatpush1.msra.mxu0 %v1325
        %1332 = vmatprep.subr.mxu0 0.0
        %1333 = vmatpush1.msra.mxu0 %v1327
        %1334 = vmatprep.subr.mxu0 0.0
        %1335 = vmatpush1.msra.mxu0 0.0
        %1336 = vmatprep.subr.mxu0 0.0
        %1337 = vmatpush1.msra.mxu0 0.0
        %1338 = vmatprep.subr.mxu0 0.0
        %1339 = vmatpush1.msra.mxu0 0.0
        %1340 = vmatprep.subr.mxu0 0.0
        %1341 = vmatpush1.msra.mxu0 0.0
        %1342 = vmatprep.subr.mxu0 0.0
        %1343 = vmatpush1.msra.mxu0 0.0
        %1344 = vmatprep.subr.mxu0 0.0
        %1345 = vmatpush1.msra.mxu0 0.0
        %1346 = vmatprep.subr.mxu0 0.0
        %1347 = vmatpush1.msra.mxu0 0.0
        %1348 = vmatprep.subr.mxu0 0.0
        %1349 = vmatpush1.msra.mxu0 0.0
        %1350 = vmatprep.subr.mxu0 0.0
        %1351 = vmatpush1.msra.mxu0 0.0
        %1352 = vmatprep.subr.mxu0 0.0
        %1353 = vmatpush1.msra.mxu0 0.0
        %1354 = vmatprep.subr.mxu0 0.0
        %1355 = vmatpush1.msra.mxu0 0.0
        %1356 = vmatprep.subr.mxu0 0.0
        %1357 = vmatpush1.msra.mxu0 0.0
        %1358 = vmatprep.subr.mxu0 0.0
        %1359 = vmatpush1.msra.mxu0 0.0
        %1360 = vmatprep.subr.mxu0 0.0
        %1361 = vmatpush1.msra.mxu0 0.0
        %1362 = vmatprep.subr.mxu0 0.0
        %1363 = vmatpush1.msra.mxu0 0.0
        %1364 = vmatprep.subr.mxu0 0.0
        %1365 = vmatpush1.msra.mxu0 0.0
        %1366 = vmatprep.subr.mxu0 0.0
        %1367 = vmatpush1.msra.mxu0 0.0
        %1368 = vmatprep.subr.mxu0 0.0
        %1369 = vmatpush1.msra.mxu0 0.0
        %1370 = vmatprep.subr.mxu0 0.0
        %1371 = vmatpush1.msra.mxu0 0.0
        %1372 = vmatprep.subr.mxu0 0.0
        %1373 = vmatpush1.msra.mxu0 0.0
        %1374 = vmatprep.subr.mxu0 0.0
        %1375 = vmatpush1.msra.mxu0 0.0
        %1376 = vmatprep.subr.mxu0 0.0
        %1377 = vmatpush1.msra.mxu0 0.0
        %1378 = vmatprep.subr.mxu0 0.0
        %1379 = vmatpush1.msra.mxu0 0.0
        %1380 = vmatprep.subr.mxu0 0.0
        %1381 = vmatpush1.msra.mxu0 0.0
        %1382 = vmatprep.subr.mxu0 0.0
        %1383 = vmatpush1.msra.mxu0 0.0
        %1384 = vmatprep.subr.mxu0 0.0
        %1385 = vmatpush1.msra.mxu0 0.0
        %1386 = vmatprep.subr.mxu0 0.0
        %1387 = vmatpush1.msra.mxu0 0.0
        %1388 = vmatprep.subr.mxu0 0.0
        %1389 = vmatpush1.msra.mxu0 0.0
        %1390 = vmatprep.subr.mxu0 0.0
        %1391 = vmatpush1.msra.mxu0 0.0
        %1392 = vmatprep.subr.mxu0 0.0
        %1393 = vmatpush1.msra.mxu0 0.0
        %1394 = vmatprep.mubr.f32.mxu0 0.0
        %1395 = vmatmul.mubr.f32.gmra.mrb[0].mxu0 %v1241
        %v1396 = vpop.f32.mrb[0].mxu0
        %v1397 = vadd.f32 0.0, %v1396
        %v1398 = vpop.f32.mrb[0].mxu0
        %1399 = vmatprep.mubr.f32.mxu0 0.0
        %1400 = vmatmul.mubr.f32.gmra.mrb[0].mxu0 %v1244
        %v1401 = vpop.f32.mrb[0].mxu0
        %v1402 = vadd.f32 0.0, %v1401
        %v1403 = vpop.f32.mrb[0].mxu0
        %1404 = vdwg.mxu0
        %1407 = vrot.lane.b32.xlu0 %v1397, 64
        %v1408 = vpop.permute.xlu0 %1407
        %1409 = vrot.lane.b32.xlu0 %v1402, 64
        %v1410 = vpop.permute.xlu0 %1409
        %vm1413 = vcmask 785920
        %1414 = vst.msk [vmem:[#allocation2] sm:$0xff] %vm1413, %v1408
        %1415 = vst.msk [vmem:[#allocation2 + $0x8] sm:$0xff] %vm1413, %v1410
        %1416 = vrot.lane.b32.xlu0 %v446, 32
        %v1417 = vpop.permute.xlu0 %1416
        %1418 = vrot.lane.b32.xlu0 %v452, 32
        %v1419 = vpop.permute.xlu0 %1418
        %1420 = vrot.lane.b32.xlu0 %v448, 32
        %v1421 = vpop.permute.xlu0 %1420
        %1422 = vrot.lane.b32.xlu0 %v454, 32
        %v1423 = vpop.permute.xlu0 %1422
        %v1424 = vsel %vm559, %v1417, 0
        %v1426 = vsel %vm559, %v1419, 0
        %v1428 = vsel %vm559, %v1421, 0
        %v1430 = vsel %vm559, %v1423, 0
        %1432 = vmatprep.subr.mxu0 0.0
        %1433 = vmatpush1.xpose.msra.mxu0 %v1428
        %1434 = vmatprep.subr.mxu0 0.0
        %1435 = vmatpush1.xpose.msra.mxu0 %v1430
        %1436 = vmatprep.subr.mxu0 0.0
        %1437 = vmatpush1.xpose.msra.mxu0 0.0
        %1438 = vmatprep.subr.mxu0 0.0
        %1439 = vmatpush1.xpose.msra.mxu0 0.0
        %1440 = vmatprep.subr.mxu0 0.0
        %1441 = vmatpush1.xpose.msra.mxu0 0.0
        %1442 = vmatprep.subr.mxu0 0.0
        %1443 = vmatpush1.xpose.msra.mxu0 0.0
        %1444 = vmatprep.subr.mxu0 0.0
        %1445 = vmatpush1.xpose.msra.mxu0 0.0
        %1446 = vmatprep.subr.mxu0 0.0
        %1447 = vmatpush1.xpose.msra.mxu0 0.0
        %1448 = vmatprep.subr.mxu0 0.0
        %1449 = vmatpush1.xpose.msra.mxu0 0.0
        %1450 = vmatprep.subr.mxu0 0.0
        %1451 = vmatpush1.xpose.msra.mxu0 0.0
        %1452 = vmatprep.subr.mxu0 0.0
        %1453 = vmatpush1.xpose.msra.mxu0 0.0
        %1454 = vmatprep.subr.mxu0 0.0
        %1455 = vmatpush1.xpose.msra.mxu0 0.0
        %1456 = vmatprep.subr.mxu0 0.0
        %1457 = vmatpush1.xpose.msra.mxu0 0.0
        %1458 = vmatprep.subr.mxu0 0.0
        %1459 = vmatpush1.xpose.msra.mxu0 0.0
        %1460 = vmatprep.subr.mxu0 0.0
        %1461 = vmatpush1.xpose.msra.mxu0 0.0
        %1462 = vmatprep.subr.mxu0 0.0
        %1463 = vmatpush1.xpose.msra.mxu0 0.0
        %1464 = vmatprep.subr.mxu0 0.0
        %1465 = vmatpush1.xpose.msra.mxu0 0.0
        %1466 = vmatprep.subr.mxu0 0.0
        %1467 = vmatpush1.xpose.msra.mxu0 0.0
        %1468 = vmatprep.subr.mxu0 0.0
        %1469 = vmatpush1.xpose.msra.mxu0 0.0
        %1470 = vmatprep.subr.mxu0 0.0
        %1471 = vmatpush1.xpose.msra.mxu0 0.0
        %1472 = vmatprep.subr.mxu0 0.0
        %1473 = vmatpush1.xpose.msra.mxu0 0.0
        %1474 = vmatprep.subr.mxu0 0.0
        %1475 = vmatpush1.xpose.msra.mxu0 0.0
        %1476 = vmatprep.subr.mxu0 0.0
        %1477 = vmatpush1.xpose.msra.mxu0 0.0
        %1478 = vmatprep.subr.mxu0 0.0
        %1479 = vmatpush1.xpose.msra.mxu0 0.0
        %1480 = vmatprep.subr.mxu0 0.0
        %1481 = vmatpush1.xpose.msra.mxu0 0.0
        %1482 = vmatprep.subr.mxu0 0.0
        %1483 = vmatpush1.xpose.msra.mxu0 0.0
        %1484 = vmatprep.subr.mxu0 0.0
        %1485 = vmatpush1.xpose.msra.mxu0 0.0
        %1486 = vmatprep.subr.mxu0 0.0
        %1487 = vmatpush1.xpose.msra.mxu0 0.0
        %1488 = vmatprep.subr.mxu0 0.0
        %1489 = vmatpush1.xpose.msra.mxu0 0.0
        %1490 = vmatprep.subr.mxu0 0.0
        %1491 = vmatpush1.xpose.msra.mxu0 0.0
        %1492 = vmatprep.subr.mxu0 0.0
        %1493 = vmatpush1.xpose.msra.mxu0 0.0
        %1494 = vmatprep.subr.mxu0 0.0
        %1495 = vmatpush1.xpose.msra.mxu0 0.0
        %1496 = vmatprep.mubr.f32.mxu0 0.0
        %1497 = vmatmul.mubr.f32.gmra.mrb[0].mxu0 %v1424
        %v1498 = vpop.f32.mrb[0].mxu0
        %v1499 = vadd.f32 0.0, %v1498
        %v1500 = vpop.f32.mrb[0].mxu0
        %1501 = vmatprep.mubr.f32.mxu0 0.0
        %1502 = vmatmul.mubr.f32.gmra.mrb[0].mxu0 %v1426
        %v1503 = vpop.f32.mrb[0].mxu0
        %v1504 = vadd.f32 0.0, %v1503
        %v1505 = vpop.f32.mrb[0].mxu0
        %1506 = vdwg.mxu0
        %v1507 = vmul.f32 %v1499, 0.17677669
        %v1508 = vmul.f32 %v1504, 0.17677669
        %v1509 = vsel %vm649, %v1507, -inf
        %1510 = vmax.xlane.f32.xlu0 %v1509
        %v1511 = vpop.xlane.xlu0 %1510
        %v1512 = vsel %vm649, %v1508, -inf
        %1513 = vmax.xlane.f32.xlu0 %v1512
        %v1514 = vpop.xlane.xlu0 %1513
        %v1515 = vsub.f32 %v1507, %v1511
        %v1516 = vsub.f32 %v1508, %v1514
        %v1517 = vmul.f32 %v1515, 1.442695
        %v1518 = vpow.pop %v1517
        %v1519 = vmul.f32 %v1516, 1.442695
        %v1520 = vpow.pop %v1519
        %v1521 = vsel %vm649, %v1518, 0.0
        %1522 = vadd.xlane.f32.xlu0 %v1521
        %v1523 = vpop.xlane.xlu0 %1522
        %v1524 = vsel %vm649, %v1520, 0.0
        %1525 = vadd.xlane.f32.xlu0 %v1524
        %v1526 = vpop.xlane.xlu0 %1525
        %v1527 = vrcp.pop %v1523
        %v1528 = vrcp.pop %v1526
        %v1529 = vmul.f32 %v1518, %v1527
        %v1530 = vmul.f32 %v1520, %v1528
        %v1532 = vsel %vm649, %v1529, 0
        %v1535 = vsel %vm649, %v1530, 0
        %1537 = vmatprep.subr.mxu0 0.0
        %1538 = vmatpush1.msra.mxu0 %v540
        %1539 = vmatprep.subr.mxu0 0.0
        %1540 = vmatpush1.msra.mxu0 %v541
        %1541 = vmatprep.subr.mxu0 0.0
        %1542 = vmatpush1.msra.mxu0 0.0
        %1543 = vmatprep.subr.mxu0 0.0
        %1544 = vmatpush1.msra.mxu0 0.0
        %1545 = vmatprep.subr.mxu0 0.0
        %1546 = vmatpush1.msra.mxu0 0.0
        %1547 = vmatprep.subr.mxu0 0.0
        %1548 = vmatpush1.msra.mxu0 0.0
        %1549 = vmatprep.subr.mxu0 0.0
        %1550 = vmatpush1.msra.mxu0 0.0
        %1551 = vmatprep.subr.mxu0 0.0
        %1552 = vmatpush1.msra.mxu0 0.0
        %1553 = vmatprep.subr.mxu0 0.0
        %1554 = vmatpush1.msra.mxu0 0.0
        %1555 = vmatprep.subr.mxu0 0.0
        %1556 = vmatpush1.msra.mxu0 0.0
        %1557 = vmatprep.subr.mxu0 0.0
        %1558 = vmatpush1.msra.mxu0 0.0
        %1559 = vmatprep.subr.mxu0 0.0
        %1560 = vmatpush1.msra.mxu0 0.0
        %1561 = vmatprep.subr.mxu0 0.0
        %1562 = vmatpush1.msra.mxu0 0.0
        %1563 = vmatprep.subr.mxu0 0.0
        %1564 = vmatpush1.msra.mxu0 0.0
        %1565 = vmatprep.subr.mxu0 0.0
        %1566 = vmatpush1.msra.mxu0 0.0
        %1567 = vmatprep.subr.mxu0 0.0
        %1568 = vmatpush1.msra.mxu0 0.0
        %1569 = vmatprep.subr.mxu0 0.0
        %1570 = vmatpush1.msra.mxu0 0.0
        %1571 = vmatprep.subr.mxu0 0.0
        %1572 = vmatpush1.msra.mxu0 0.0
        %1573 = vmatprep.subr.mxu0 0.0
        %1574 = vmatpush1.msra.mxu0 0.0
        %1575 = vmatprep.subr.mxu0 0.0
        %1576 = vmatpush1.msra.mxu0 0.0
        %1577 = vmatprep.subr.mxu0 0.0
        %1578 = vmatpush1.msra.mxu0 0.0
        %1579 = vmatprep.subr.mxu0 0.0
        %1580 = vmatpush1.msra.mxu0 0.0
        %1581 = vmatprep.subr.mxu0 0.0
        %1582 = vmatpush1.msra.mxu0 0.0
        %1583 = vmatprep.subr.mxu0 0.0
        %1584 = vmatpush1.msra.mxu0 0.0
        %1585 = vmatprep.subr.mxu0 0.0
        %1586 = vmatpush1.msra.mxu0 0.0
        %1587 = vmatprep.subr.mxu0 0.0
        %1588 = vmatpush1.msra.mxu0 0.0
        %1589 = vmatprep.subr.mxu0 0.0
        %1590 = vmatpush1.msra.mxu0 0.0
        %1591 = vmatprep.subr.mxu0 0.0
        %1592 = vmatpush1.msra.mxu0 0.0
        %1593 = vmatprep.subr.mxu0 0.0
        %1594 = vmatpush1.msra.mxu0 0.0
        %1595 = vmatprep.subr.mxu0 0.0
        %1596 = vmatpush1.msra.mxu0 0.0
        %1597 = vmatprep.subr.mxu0 0.0
        %1598 = vmatpush1.msra.mxu0 0.0
        %1599 = vmatprep.subr.mxu0 0.0
        %1600 = vmatpush1.msra.mxu0 0.0
        %1601 = vmatprep.mubr.f32.mxu0 0.0
        %1602 = vmatmul.mubr.f32.gmra.mrb[0].mxu0 %v1532
        %v1603 = vpop.f32.mrb[0].mxu0
        %v1604 = vadd.f32 0.0, %v1603
        %v1605 = vpop.f32.mrb[0].mxu0
        %1606 = vmatprep.mubr.f32.mxu0 0.0
        %1607 = vmatmul.mubr.f32.gmra.mrb[0].mxu0 %v1535
        %v1608 = vpop.f32.mrb[0].mxu0
        %v1609 = vadd.f32 0.0, %v1608
        %v1610 = vpop.f32.mrb[0].mxu0
        %1611 = vdwg.mxu0
        %s1612 = scalar_lea.vmem %s309, 48 [#allocation10]
        %1613 = vst [vmem:[%s1612] sm:$0xff] %v1604
        %1614 = vst [vmem:[%s1612 + $0x8] sm:$0xff] %v1609
        %1615 = vrot.lane.b32.xlu0 %v523, 32
        %v1616 = vpop.permute.xlu0 %1615
        %1617 = vrot.lane.b32.xlu0 %v528, 32
        %v1618 = vpop.permute.xlu0 %1617
        %1621 = vmatprep.subr.mxu0 0.0
        %1622 = vmatpush1.msra.mxu0 %v1616
        %1623 = vmatprep.subr.mxu0 0.0
        %1624 = vmatpush1.msra.mxu0 %v1618
        %1625 = vmatprep.subr.mxu0 0.0
        %1626 = vmatpush1.msra.mxu0 0.0
        %1627 = vmatprep.subr.mxu0 0.0
        %1628 = vmatpush1.msra.mxu0 0.0
        %1629 = vmatprep.subr.mxu0 0.0
        %1630 = vmatpush1.msra.mxu0 0.0
        %1631 = vmatprep.subr.mxu0 0.0
        %1632 = vmatpush1.msra.mxu0 0.0
        %1633 = vmatprep.subr.mxu0 0.0
        %1634 = vmatpush1.msra.mxu0 0.0
        %1635 = vmatprep.subr.mxu0 0.0
        %1636 = vmatpush1.msra.mxu0 0.0
        %1637 = vmatprep.subr.mxu0 0.0
        %1638 = vmatpush1.msra.mxu0 0.0
        %1639 = vmatprep.subr.mxu0 0.0
        %1640 = vmatpush1.msra.mxu0 0.0
        %1641 = vmatprep.subr.mxu0 0.0
        %1642 = vmatpush1.msra.mxu0 0.0
        %1643 = vmatprep.subr.mxu0 0.0
        %1644 = vmatpush1.msra.mxu0 0.0
        %1645 = vmatprep.subr.mxu0 0.0
        %1646 = vmatpush1.msra.mxu0 0.0
        %1647 = vmatprep.subr.mxu0 0.0
        %1648 = vmatpush1.msra.mxu0 0.0
        %1649 = vmatprep.subr.mxu0 0.0
        %1650 = vmatpush1.msra.mxu0 0.0
        %1651 = vmatprep.subr.mxu0 0.0
        %1652 = vmatpush1.msra.mxu0 0.0
        %1653 = vmatprep.subr.mxu0 0.0
        %1654 = vmatpush1.msra.mxu0 0.0
        %1655 = vmatprep.subr.mxu0 0.0
        %1656 = vmatpush1.msra.mxu0 0.0
        %1657 = vmatprep.subr.mxu0 0.0
        %1658 = vmatpush1.msra.mxu0 0.0
        %1659 = vmatprep.subr.mxu0 0.0
        %1660 = vmatpush1.msra.mxu0 0.0
        %1661 = vmatprep.subr.mxu0 0.0
        %1662 = vmatpush1.msra.mxu0 0.0
        %1663 = vmatprep.subr.mxu0 0.0
        %1664 = vmatpush1.msra.mxu0 0.0
        %1665 = vmatprep.subr.mxu0 0.0
        %1666 = vmatpush1.msra.mxu0 0.0
        %1667 = vmatprep.subr.mxu0 0.0
        %1668 = vmatpush1.msra.mxu0 0.0
        %1669 = vmatprep.subr.mxu0 0.0
        %1670 = vmatpush1.msra.mxu0 0.0
        %1671 = vmatprep.subr.mxu0 0.0
        %1672 = vmatpush1.msra.mxu0 0.0
        %1673 = vmatprep.subr.mxu0 0.0
        %1674 = vmatpush1.msra.mxu0 0.0
        %1675 = vmatprep.subr.mxu0 0.0
        %1676 = vmatpush1.msra.mxu0 0.0
        %1677 = vmatprep.subr.mxu0 0.0
        %1678 = vmatpush1.msra.mxu0 0.0
        %1679 = vmatprep.subr.mxu0 0.0
        %1680 = vmatpush1.msra.mxu0 0.0
        %1681 = vmatprep.subr.mxu0 0.0
        %1682 = vmatpush1.msra.mxu0 0.0
        %1683 = vmatprep.subr.mxu0 0.0
        %1684 = vmatpush1.msra.mxu0 0.0
        %1685 = vmatprep.mubr.f32.mxu0 0.0
        %1686 = vmatmul.mubr.f32.gmra.mrb[0].mxu0 %v1532
        %v1687 = vpop.f32.mrb[0].mxu0
        %v1688 = vadd.f32 0.0, %v1687
        %v1689 = vpop.f32.mrb[0].mxu0
        %1690 = vmatprep.mubr.f32.mxu0 0.0
        %1691 = vmatmul.mubr.f32.gmra.mrb[0].mxu0 %v1535
        %v1692 = vpop.f32.mrb[0].mxu0
        %v1693 = vadd.f32 0.0, %v1692
        %v1694 = vpop.f32.mrb[0].mxu0
        %1695 = vdwg.mxu0
        %1698 = vrot.lane.b32.xlu0 %v1688, 96
        %v1699 = vpop.permute.xlu0 %1698
        %1700 = vrot.lane.b32.xlu0 %v1693, 96
        %v1701 = vpop.permute.xlu0 %1700
        %vm1704 = vcmask 1048320
        %1705 = vst.msk [vmem:[#allocation2] sm:$0xff] %vm1704, %v1699
        %1706 = vst.msk [vmem:[#allocation2 + $0x8] sm:$0xff] %vm1704, %v1701
        %v1707 = vld [vmem:[#allocation2] sm:$0xff]
        %v1708 = vld [vmem:[#allocation2 + $0x8] sm:$0xff]
        %v1710 = vlaneseq
        %v1711 = vshrl.u32 %v1710, 7
        %v1712 = vsub.s32 0, %v1711
        %v1713 = vrot.slane %v558, %v1712
        %1715 = vmatprep.subr.mxu0 0.0
        %1716 = vmatpush1.msra.mxu0 %v542
        %1717 = vmatprep.subr.mxu0 0.0
        %1718 = vmatpush1.msra.mxu0 %v543
        %1719 = vmatprep.subr.mxu0 0.0
        %1720 = vmatpush1.msra.mxu0 %v544
        %1721 = vmatprep.subr.mxu0 0.0
        %1722 = vmatpush1.msra.mxu0 %v545
        %1723 = vmatprep.subr.mxu0 0.0
        %1724 = vmatpush1.msra.mxu0 %v546
        %1725 = vmatprep.subr.mxu0 0.0
        %1726 = vmatpush1.msra.mxu0 %v547
        %1727 = vmatprep.subr.mxu0 0.0
        %1728 = vmatpush1.msra.mxu0 %v548
        %1729 = vmatprep.subr.mxu0 0.0
        %1730 = vmatpush1.msra.mxu0 %v549
        %1731 = vmatprep.subr.mxu0 0.0
        %1732 = vmatpush1.msra.mxu0 %v550
        %1733 = vmatprep.subr.mxu0 0.0
        %1734 = vmatpush1.msra.mxu0 %v551
        %1735 = vmatprep.subr.mxu0 0.0
        %1736 = vmatpush1.msra.mxu0 %v552
        %1737 = vmatprep.subr.mxu0 0.0
        %1738 = vmatpush1.msra.mxu0 %v553
        %1739 = vmatprep.subr.mxu0 0.0
        %1740 = vmatpush1.msra.mxu0 %v554
        %1741 = vmatprep.subr.mxu0 0.0
        %1742 = vmatpush1.msra.mxu0 %v555
        %1743 = vmatprep.subr.mxu0 0.0
        %1744 = vmatpush1.msra.mxu0 %v556
        %1745 = vmatprep.subr.mxu0 0.0
        %1746 = vmatpush1.msra.mxu0 %v557
        %1747 = vmatprep.subr.mxu0 0.0
        %1748 = vmatpush1.msra.mxu0 0.0
        %1749 = vmatprep.subr.mxu0 0.0
        %1750 = vmatpush1.msra.mxu0 0.0
        %1751 = vmatprep.subr.mxu0 0.0
        %1752 = vmatpush1.msra.mxu0 0.0
        %1753 = vmatprep.subr.mxu0 0.0
        %1754 = vmatpush1.msra.mxu0 0.0
        %1755 = vmatprep.subr.mxu0 0.0
        %1756 = vmatpush1.msra.mxu0 0.0
        %1757 = vmatprep.subr.mxu0 0.0
        %1758 = vmatpush1.msra.mxu0 0.0
        %1759 = vmatprep.subr.mxu0 0.0
        %1760 = vmatpush1.msra.mxu0 0.0
        %1761 = vmatprep.subr.mxu0 0.0
        %1762 = vmatpush1.msra.mxu0 0.0
        %1763 = vmatprep.subr.mxu0 0.0
        %1764 = vmatpush1.msra.mxu0 0.0
        %1765 = vmatprep.subr.mxu0 0.0
        %1766 = vmatpush1.msra.mxu0 0.0
        %1767 = vmatprep.subr.mxu0 0.0
        %1768 = vmatpush1.msra.mxu0 0.0
        %1769 = vmatprep.subr.mxu0 0.0
        %1770 = vmatpush1.msra.mxu0 0.0
        %1771 = vmatprep.subr.mxu0 0.0
        %1772 = vmatpush1.msra.mxu0 0.0
        %1773 = vmatprep.subr.mxu0 0.0
        %1774 = vmatpush1.msra.mxu0 0.0
        %1775 = vmatprep.subr.mxu0 0.0
        %1776 = vmatpush1.msra.mxu0 0.0
        %1777 = vmatprep.subr.mxu0 0.0
        %1778 = vmatpush1.msra.mxu0 0.0
        %1779 = vmatprep.mubr.f32.mxu0 0.0
        %1780 = vmatmul.mubr.f32.gmra.mrb[0].mxu0 %v1707
        %v1781 = vpop.f32.mrb[0].mxu0
        %v1782 = vadd.f32 %v1713, %v1781
        %v1783 = vpop.f32.mrb[0].mxu0
        %1784 = vmatprep.mubr.f32.mxu0 0.0
        %1785 = vmatmul.mubr.f32.gmra.mrb[0].mxu0 %v1708
        %v1786 = vpop.f32.mrb[0].mxu0
        %v1787 = vadd.f32 %v1713, %v1786
        %v1788 = vpop.f32.mrb[0].mxu0
        %1789 = vdwg.mxu0
        %1790 = vst [vmem:[%s302] sm:$0xff] %v1782
        %1791 = vst [vmem:[%s302 + $0x8] sm:$0xff] %v1787
        %s1792 = sand.u32 %s146, 1
        %s1793 = scalar_lea.sflag [#allocation5], %s1792
        %s1794 = sand.u32 %s146, 1
        %s1795 = smul.addr %s1794, 16
        %s1796 = scalar_lea.vmem [#allocation9], %s1795
        %s1797 = sand.u32 %s172, 1
        %s1798 = scalar_lea.sflag [#allocation11], %s1797
        %s1799 = sand.u32 %s172, 1
        %s1800 = smul.addr %s1799, 64
        %s1801 = scalar_lea.vmem [#allocation10], %s1800
        // Predicated region
        $region53: #{tpu_custom_call.1} parent=39 // pred_check
          %p1802 = pneg %p156
        $region54: #{tpu_custom_call.1} parent=39 // pred_check_branch
          %1804 = sbr.rel (%p1802) target = $region56
        $region55: #{tpu_custom_call.1} parent=39 // pred_region
          %s1805 = smul.u32 2, %s28
          %s1807 = ssub.s32 256, 256
          %1808 = vsyncadd %s1793, %s1807
          %s1809 = smul.addr %s1805, 128
          %s1810 = scalar_lea.hbm %s5, %s1809
          %s1811 = sshll.u32 %s1796, 4
          %s1812 = int_to_ptr.vmem [resolvable:$true] %s1811
          %1817 = dma.vmem_to_hbm [thread:$0]  %s1812, 256, %s1810, %s1793, 128, 128, 8
        $region56: #{tpu_custom_call.1} parent=39 // pred_fallthru
          _
        // Predicated region
        $region57: #{tpu_custom_call.1} parent=39 // pred_check
          %p1818 = pneg %p182
        $region58: #{tpu_custom_call.1} parent=39 // pred_check_branch
          %1820 = sbr.rel (%p1818) target = $region60
        $region59: #{tpu_custom_call.1} parent=39 // pred_region
          %s1822 = ssub.s32 1024, 1024
          %1823 = vsyncadd %s1798, %s1822
          %s1824 = smul.addr %s28, 8
          %s1825 = smul.addr %s1824, 128
          %s1826 = scalar_lea.hbm %s6, %s1825
          %s1827 = sshll.u32 %s1801, 4
          %s1828 = int_to_ptr.vmem [resolvable:$true] %s1827
          %1833 = dma.vmem_to_hbm [thread:$0]  %s1828, 1024, %s1826, %s1798, 128, 128, 8
        $region60: #{tpu_custom_call.1} parent=39 // pred_fallthru
          _
      $region40: #{tpu_custom_call.1} parent=5 // pred_fallthru
        _
      %p1834 = scmp.le.s32.totalorder 2, %s23
      // Predicated region
      $region61: #{tpu_custom_call.1} parent=5 // pred_check
        %p1835 = pneg %p1834
      $region62: #{tpu_custom_call.1} parent=5 // pred_check_branch
        %1837 = sbr.rel (%p1835) target = $region64
      $region63: #{tpu_custom_call.1} parent=5 // pred_region
        %s1838 = ssub.s32 %s23, 2
        // Predicated region
        $region65: #{tpu_custom_call.1} parent=63 // pred_check
          %p1839 = pneg %p162
        $region66: #{tpu_custom_call.1} parent=63 // pred_check_branch
          %1841 = sbr.rel (%p1839) target = $region68
        $region67: #{tpu_custom_call.1} parent=63 // pred_region
          %s1842 = sand.u32 %s147, 1
          %s1843 = scalar_lea.sflag [#allocation5], %s1842
          %s1844 = sand.u32 %s147, 1
          %s1845 = smul.addr %s1844, 16
          %s1846 = scalar_lea.vmem [#allocation9], %s1845
          %1847 = dma.done %s1843, 256
        $region68: #{tpu_custom_call.1} parent=63 // pred_fallthru
          _
        // Predicated region
        $region69: #{tpu_custom_call.1} parent=63 // pred_check
          %p1848 = pneg %p188
        $region70: #{tpu_custom_call.1} parent=63 // pred_check_branch
          %1850 = sbr.rel (%p1848) target = $region72
        $region71: #{tpu_custom_call.1} parent=63 // pred_region
          %s1851 = sand.u32 %s173, 1
          %s1852 = scalar_lea.sflag [#allocation11], %s1851
          %s1853 = sand.u32 %s173, 1
          %s1854 = smul.addr %s1853, 64
          %s1855 = scalar_lea.vmem [#allocation10], %s1854
          %1856 = dma.done %s1852, 1024
        $region72: #{tpu_custom_call.1} parent=63 // pred_fallthru
          _
      $region64: #{tpu_custom_call.1} parent=5 // pred_fallthru
        _
    $region6: #{tpu_custom_call.1} parent=1 // loop_footer
      %s27 = sadd.s32 1, %s23
    $region7: #{tpu_custom_call.1} parent=1 // loop_footer_branch
      %22 = sbr.rel target = $region3
    $region8: #{tpu_custom_call.1} parent=1 // loop_exit
      _
    %1857 = vsyncpa [#allocation4], 1
    %s1858 = scalar_lea.sflag [#allocation4], 1
    %1859 = vsyncpa %s1858, 1
    %1860 = vsyncpa [#allocation7], 1
    %1861 = vsyncpa [#allocation5], 1
    %s1862 = scalar_lea.sflag [#allocation5], 1
    %1863 = vsyncpa %s1862, 1
    %1864 = vsyncpa [#allocation11], 1
    %s1865 = scalar_lea.sflag [#allocation11], 1
    %1866 = vsyncpa %s1865, 1

</llo_original>
